<compile_context>
chip_gen: v7x
topology: tpu7x:2x2x1
jax: 0.10.0
libtpu: 0.0.40
codegen_flags: <defaults>
</compile_context>

<pallas_src>
import functools

import jax
import jax.numpy as jnp
import numpy as np
from jax import lax
from jax.experimental import pallas as pl
from jax.experimental.pallas import tpu as pltpu

C_PAD = 128                                 # lane-dense class padding
_VMEM_LIMIT_BYTES = 48 * 1024 * 1024        # fits v7x 64 MiB physical with headroom
_FUSED_VMEM_BUDGET = 40 * 1024 * 1024       # resident-A (fused) path cutover


# ----------------------------- Pallas kernels --------------------------------
def fused_kernel(a_ref, xcat_ref, bcat_ref, wp2_ref, bp_ref, o_ref, *,
                 nfeat, nclass):
    """Whole-graph, VMEM-resident forward. A_hat is DMA'd from HBM exactly once.

    a_ref    : [N, N]     bf16  padded A_hat
    xcat_ref : [N, Fp]    bf16  [x | x@Wc | 0]
    bcat_ref : [1, Fp]    f32   conv bias in lanes [F, 2F)
    wp2_ref  : [Fp, 128]  bf16  classifier weight replicated for both halves
    bp_ref   : [1, 128]   f32   classifier bias (real lanes only)
    o_ref    : [N, 128]   f32   log-probs (padded lanes/rows sliced off outside)
    """
    # one propagation produces both A@x (lanes [0,F)) and (A@x)@Wc (lanes [F,2F))
    axc = jnp.dot(a_ref[...], xcat_ref[...], preferred_element_type=jnp.float32)
    lane = lax.broadcasted_iota(jnp.int32, axc.shape, 1)
    # hcat = [ A@x | relu((A@x)@Wc + bc) | 0 ]  ->  hp = hcat @ Wp2 == h @ Wp
    hcat = jnp.where(lane < nfeat, axc, jnp.maximum(axc + bcat_ref[...], 0.0))
    # F.dropout(..., training=False) -> identity
    hp = jnp.dot(hcat.astype(wp2_ref.dtype), wp2_ref[...],
                 preferred_element_type=jnp.float32)
    logits = jnp.dot(a_ref[...], hp.astype(a_ref.dtype),
                     preferred_element_type=jnp.float32) + bp_ref[...]
    clane = lax.broadcasted_iota(jnp.int32, logits.shape, 1)
    logits = jnp.where(clane < nclass, logits, -1e30)   # explicit pad-lane mask
    m = jnp.max(logits, axis=-1, keepdims=True)
    lse = jnp.log(jnp.sum(jnp.exp(logits - m), axis=-1, keepdims=True)) + m
    o_ref[...] = logits - lse


def stage1_kernel(a_ref, xcat_ref, bcat_ref, wp2_ref, hp_ref, acc_ref, *,
                  nfeat, t_k):
    """Row-tile of  hp = ([A@x | relu((A@x)@Wc + bc)]) @ Wp2.

    Grid = (row_tiles, k_tiles); axis 1 reduces over A_hat column tiles.
    a_ref    : [Tm, Tk]   bf16 A_hat tile (rows i, cols k)
    xcat_ref : [N, Fp]    bf16 fully VMEM-resident [x | x@Wc | 0]
    acc_ref  : [Tm, Fp]   f32  scratch accumulator
    hp_ref   : [Tm, 128]  bf16 output tile
    """
    k = pl.program_id(1)

    @pl.when(k == 0)
    def _():
        acc_ref[...] = jnp.zeros_like(acc_ref)

    kk = pl.multiple_of(k * t_k, t_k)
    acc_ref[...] += jnp.dot(a_ref[...], xcat_ref[pl.ds(kk, t_k), :],
                            preferred_element_type=jnp.float32)

    @pl.when(k == pl.num_programs(1) - 1)
    def _():
        axc = acc_ref[...]
        lane = lax.broadcasted_iota(jnp.int32, axc.shape, 1)
        hcat = jnp.where(lane < nfeat, axc, jnp.maximum(axc + bcat_ref[...], 0.0))
        hp_ref[...] = jnp.dot(hcat.astype(wp2_ref.dtype), wp2_ref[...],
                              preferred_element_type=jnp.float32
                              ).astype(hp_ref.dtype)


def stage2_kernel(a_ref, hp_ref, bp_ref, o_ref, acc_ref, *, nclass, t_k):
    """Row-tile of  out = log_softmax(A_hat @ hp + bp).

    a_ref  : [Tm, Tk]   bf16 A_hat tile
    hp_ref : [N, 128]   bf16 fully VMEM-resident projected features
    acc_ref: [Tm, 128]  f32  scratch accumulator
    o_ref  : [Tm, 128]  f32  log-prob tile (lane-dense store)
    """
    k = pl.program_id(1)

    @pl.when(k == 0)
    def _():
        acc_ref[...] = jnp.zeros_like(acc_ref)

    kk = pl.multiple_of(k * t_k, t_k)
    acc_ref[...] += jnp.dot(a_ref[...], hp_ref[pl.ds(kk, t_k), :],
                            preferred_element_type=jnp.float32)

    @pl.when(k == pl.num_programs(1) - 1)
    def _():
        logits = acc_ref[...] + bp_ref[...]
        lane = lax.broadcasted_iota(jnp.int32, logits.shape, 1)
        logits = jnp.where(lane < nclass, logits, -1e30)
        m = jnp.max(logits, axis=-1, keepdims=True)
        lse = jnp.log(jnp.sum(jnp.exp(logits - m), axis=-1, keepdims=True)) + m
        o_ref[...] = logits - lse


# ------------------------------ glue / wrapper -------------------------------
def _round_up(v, m):
    return ((v + m - 1) // m) * m


def gcn_norm_adj(edge_index, num_nodes):
    """Dense D^{-1/2}(A + I)D^{-1/2} from a [2, E] edge_index.

    Note: duplicate edges collapse to weight 1 (PyG's gcn_norm would sum them);
    identical for simple graphs like the test ring.
    """
    src, dst = edge_index[0], edge_index[1]
    a = jnp.zeros((num_nodes, num_nodes), jnp.float32).at[dst, src].set(1.0)
    a = a + jnp.eye(num_nodes, dtype=jnp.float32)
    deg = jnp.sum(a, axis=1)
    d_inv_sqrt = 1.0 / jnp.sqrt(deg)
    return a * d_inv_sqrt[:, None] * d_inv_sqrt[None, :]


def prepare_graph(edge_index, num_nodes):
    """Build the padded bf16 A_hat ONCE per graph (hoisted out of the forward)."""
    n_pad = _round_up(num_nodes, 128)
    a = gcn_norm_adj(edge_index, num_nodes)
    a_p = jnp.zeros((n_pad, n_pad), jnp.float32).at[:num_nodes, :num_nodes].set(a)
    return a_p.astype(jnp.bfloat16)


def _fused_vmem_estimate(n_pad, f_pad):
    """Conservative VMEM estimate for the resident-A fused path (bytes)."""
    a = 2 * n_pad * n_pad * 2                      # bf16 A, x2 pipeline buffers
    xin = 2 * n_pad * f_pad * 2                    # xcat bf16
    out = 2 * n_pad * C_PAD * 4                    # f32 output
    tmp = 4 * n_pad * max(f_pad, C_PAD) * 4        # axc / hcat / hp / logits temps
    w = f_pad * C_PAD * 2 + (f_pad + C_PAD) * 4
    return a + xin + out + tmp + w


def _pick_tiles(n_pad):
    """Tiles for the streamed (two-stage) path."""
    # contraction tile: multiple of 256 fills the 256-deep MXU on v6e/v7x;
    # 128 is already native on v5e.
    if n_pad % 512 == 0 and n_pad >= 1024:
        t_k = 512
    elif n_pad % 256 == 0:
        t_k = 256
    else:
        t_k = 128
    # row tile: big, but keep >= 2 row tiles so v7x's two TensorCores both work.
    if n_pad % 256 == 0 and n_pad // 256 >= 2:
        t_m = 256
    elif n_pad % 128 == 0 and n_pad // 128 >= 2:
        t_m = 128
    else:
        t_m = n_pad
    return t_m, t_k


def step_model_forward(a_bf, x, params, *, force_tiled=False):
    """StepModel forward (eval mode). a_bf = padded bf16 A_hat from prepare_graph."""
    n, f = x.shape
    n_pad = a_bf.shape[0]
    c = params["wp"].shape[1]
    f_pad = max(128, _round_up(2 * f, 128))

    # xcat = [x | x@Wc | 0]: folds the ResBlock conv weight into the single
    # A_hat propagation (A@(x@Wc) == (A@x)@Wc) and makes the feature stream
    # lane-dense. xc is a tiny [N,F]@[F,F] matmul, done in f32 in the wrapper.
    xc = jnp.dot(x, params["wc"], precision=lax.Precision.HIGHEST)
    xcat = jnp.zeros((n_pad, f_pad), jnp.float32)
    xcat = xcat.at[:n, :f].set(x).at[:n, f:2 * f].set(xc)
    xcat_bf = xcat.astype(jnp.bfloat16)

    # conv bias lives in lanes [F, 2F); other lanes 0.
    bcat = jnp.zeros((1, f_pad), jnp.float32).at[:, f:2 * f].set(params["bc"])

    # Wp2: classifier weight replicated for the (A@x) and relu(conv) halves of
    # hcat, so hp = hcat @ Wp2 == (relu(conv) + A@x) @ Wp with a 128-deep,
    # lane-dense contraction.
    wp2 = jnp.zeros((f_pad, C_PAD), jnp.float32)
    wp2 = wp2.at[:f, :c].set(params["wp"]).at[f:2 * f, :c].set(params["wp"])
    wp2_bf = wp2.astype(jnp.bfloat16)

    bp_pad = jnp.zeros((1, C_PAD), jnp.float32).at[:, :c].set(params["bp"])

    use_fused = (not force_tiled) and (
        _fused_vmem_estimate(n_pad, f_pad) <= _FUSED_VMEM_BUDGET)

    if use_fused:
        # ---- fused, fully VMEM-resident path: A_hat streamed from HBM once ----
        out_pad = pl.pallas_call(
            functools.partial(fused_kernel, nfeat=f, nclass=c),
            out_shape=jax.ShapeDtypeStruct((n_pad, C_PAD), jnp.float32),
            grid_spec=pltpu.PrefetchScalarGridSpec(
                num_scalar_prefetch=0,
                grid=(1,),
                in_specs=[
                    pl.BlockSpec((n_pad, n_pad), lambda i: (0, 0)),    # A_hat
                    pl.BlockSpec((n_pad, f_pad), lambda i: (0, 0)),    # xcat
                    pl.BlockSpec((1, f_pad), lambda i: (0, 0)),        # bcat
                    pl.BlockSpec((f_pad, C_PAD), lambda i: (0, 0)),    # Wp2
                    pl.BlockSpec((1, C_PAD), lambda i: (0, 0)),        # bp
                ],
                out_specs=pl.BlockSpec((n_pad, C_PAD), lambda i: (0, 0)),
            ),
            compiler_params=pltpu.CompilerParams(
                dimension_semantics=("arbitrary",),
                vmem_limit_bytes=_VMEM_LIMIT_BYTES),
        )(a_bf, xcat_bf, bcat, wp2_bf, bp_pad)
    else:
        # ---- streamed two-stage path for graphs too large for resident A ----
        t_m, t_k = _pick_tiles(n_pad)
        grid = (n_pad // t_m, n_pad // t_k)
        cparams = pltpu.CompilerParams(
            dimension_semantics=("parallel", "arbitrary"),
            vmem_limit_bytes=_VMEM_LIMIT_BYTES)

        # Stage 1: propagation + ResBlock + classifier projection -> hp [N, 128]
        hp = pl.pallas_call(
            functools.partial(stage1_kernel, nfeat=f, t_k=t_k),
            out_shape=jax.ShapeDtypeStruct((n_pad, C_PAD), jnp.bfloat16),
            grid_spec=pltpu.PrefetchScalarGridSpec(
                num_scalar_prefetch=0,
                grid=grid,
                in_specs=[
                    pl.BlockSpec((t_m, t_k), lambda i, k: (i, k)),      # A tile
                    pl.BlockSpec((n_pad, f_pad), lambda i, k: (0, 0)),  # xcat (resident)
                    pl.BlockSpec((1, f_pad), lambda i, k: (0, 0)),      # bcat
                    pl.BlockSpec((f_pad, C_PAD), lambda i, k: (0, 0)),  # Wp2
                ],
                out_specs=pl.BlockSpec((t_m, C_PAD), lambda i, k: (i, 0)),
                scratch_shapes=[pltpu.VMEM((t_m, f_pad), jnp.float32)],
            ),
            compiler_params=cparams,
        )(a_bf, xcat_bf, bcat, wp2_bf)

        # Stage 2: propagation of projected features + bias + log_softmax.
        out_pad = pl.pallas_call(
            functools.partial(stage2_kernel, nclass=c, t_k=t_k),
            out_shape=jax.ShapeDtypeStruct((n_pad, C_PAD), jnp.float32),
            grid_spec=pltpu.PrefetchScalarGridSpec(
                num_scalar_prefetch=0,
                grid=grid,
                in_specs=[
                    pl.BlockSpec((t_m, t_k), lambda i, k: (i, k)),      # A tile
                    pl.BlockSpec((n_pad, C_PAD), lambda i, k: (0, 0)),  # hp (resident)
                    pl.BlockSpec((1, C_PAD), lambda i, k: (0, 0)),      # bp
                ],
                out_specs=pl.BlockSpec((t_m, C_PAD), lambda i, k: (i, 0)),
                scratch_shapes=[pltpu.VMEM((t_m, C_PAD), jnp.float32)],
            ),
            compiler_params=cparams,
        )(a_bf, hp, bp_pad)

    return out_pad[:n, :c]


# ------------------------------- references ----------------------------------
def reference_forward_f32(x, edge_index, params):
    """Pure-f32 pure-JAX reference (module semantics, eval mode)."""
    a_hat = gcn_norm_adj(edge_index, x.shape[0])
    ax = a_hat @ x
    h = jax.nn.relu(ax @ params["wc"] + params["bc"]) + ax      # res weight == I
    logits = a_hat @ (h @ params["wp"]) + params["bp"]
    return jax.nn.log_softmax(logits, axis=-1)


def reference_forward_bf16(x, edge_index, params):
    """Reference mirroring the kernel's bf16 MXU inputs / f32 accumulation."""
    n = x.shape[0]
    a = gcn_norm_adj(edge_index, n).astype(jnp.bfloat16)
    xc = jnp.dot(x, params["wc"], precision=lax.Precision.HIGHEST)
    x_bf = x.astype(jnp.bfloat16)
    xc_bf = xc.astype(jnp.bfloat16)
    wp_bf = params["wp"].astype(jnp.bfloat16)
    ax = jnp.dot(a, x_bf, preferred_element_type=jnp.float32)
    conv = jnp.dot(a, xc_bf, preferred_element_type=jnp.float32) + params["bc"]
    relu_conv = jnp.maximum(conv, 0.0)
    # kernel computes hp = hcat @ Wp2 = ax@Wp + relu(conv)@Wp (separate bf16 casts)
    hp = (jnp.dot(ax.astype(jnp.bfloat16), wp_bf, preferred_element_type=jnp.float32)
          + jnp.dot(relu_conv.astype(jnp.bfloat16), wp_bf,
                    preferred_element_type=jnp.float32))
    logits = jnp.dot(a, hp.astype(jnp.bfloat16),
                     preferred_element_type=jnp.float32) + params["bp"]
    return jax.nn.log_softmax(logits, axis=-1)


# ---------------------------------- main -------------------------------------
if __name__ == "__main__":
    N, F, C = 256, 32, 4          # nodes, nfeat, classes

    key = jax.random.PRNGKey(0)
    kx, kwc, kbc, kwp, kbp = jax.random.split(key, 5)

    # node features
    x = jax.random.normal(kx, (N, F), jnp.float32)

    # deterministic edge_index: bidirectional ring on N nodes
    src = np.arange(N)
    dst = (np.arange(N) + 1) % N
    edge_index = jnp.asarray(
        np.stack([np.concatenate([src, dst]), np.concatenate([dst, src])]),
        dtype=jnp.int32)

    # Parameters (deterministic). The PyTorch __init__ zero-inits the ResBlock
    # conv weight (a pre-training artifact); small random values exercise the
    # numerics. Residual GCN weight is the identity per __init__ -> folded away.
    params = {
        "wc": 0.1 * jax.random.normal(kwc, (F, F), jnp.float32),   # x @ W layout
        "bc": 0.1 * jax.random.normal(kbc, (1, F), jnp.float32),
        "wp": 0.1 * jax.random.normal(kwp, (F, C), jnp.float32),
        "bp": 0.1 * jax.random.normal(kbp, (1, C), jnp.float32),
    }

    # dense bf16 A_hat built once per graph (hoisted out of the forward)
    a_bf = jax.block_until_ready(prepare_graph(edge_index, N))

    fwd = jax.jit(step_model_forward, static_argnames=("force_tiled",))

    out_fused = jax.block_until_ready(fwd(a_bf, x, params, force_tiled=False))
    out_tiled = jax.block_until_ready(fwd(a_bf, x, params, force_tiled=True))

    ref_bf16 = reference_forward_bf16(x, edge_index, params)
    ref_f32 = reference_forward_f32(x, edge_index, params)

    for name, out in (("fused", out_fused), ("tiled", out_tiled)):
        assert out.shape == (N, C), name
        assert jnp.all(jnp.isfinite(out)), name
        # tight check vs. a reference using the same bf16 MXU inputs
        assert jnp.allclose(out, ref_bf16, atol=5e-3, rtol=5e-3), (
            f"{name} kernel mismatch vs bf16-input reference")
        # loose sanity check vs. the pure-f32 reference (bf16 quantization error)
        assert jnp.allclose(out, ref_f32, atol=1e-1, rtol=1e-1), (
            f"{name} kernel mismatch vs f32 reference")

    print("KERNEL_OK")
</pallas_src>

<mosaic_0001>
module attributes {stable_mosaic.version = 11 : i64} {
  func.func @fused_kernel(%arg0: i32, %arg1: memref<256x256xbf16, #tpu.memory_space<vmem>>, %arg2: memref<256x128xbf16, #tpu.memory_space<vmem>>, %arg3: memref<1x128xf32, #tpu.memory_space<vmem>>, %arg4: memref<128x128xbf16, #tpu.memory_space<vmem>>, %arg5: memref<1x128xf32, #tpu.memory_space<vmem>>, %arg6: memref<256x128xf32, #tpu.memory_space<vmem>>) attributes {dimension_semantics = [#tpu.dimension_semantics<arbitrary>], iteration_bounds = array<i64: 1>, scalar_prefetch = 0 : i64, scratch_operands = 0 : i64, tpu.core_type = #tpu.core_type<tc>, window_params = [{pipeline_mode = #tpu.pipeline_mode<synchronous>, transform_indices = @transform_0, window_bounds = array<i64: 256, 256>}, {pipeline_mode = #tpu.pipeline_mode<synchronous>, transform_indices = @transform_1, window_bounds = array<i64: 256, 128>}, {pipeline_mode = #tpu.pipeline_mode<synchronous>, transform_indices = @transform_2, window_bounds = array<i64: 1, 128>}, {pipeline_mode = #tpu.pipeline_mode<synchronous>, transform_indices = @transform_3, window_bounds = array<i64: 128, 128>}, {pipeline_mode = #tpu.pipeline_mode<synchronous>, transform_indices = @transform_4, window_bounds = array<i64: 1, 128>}, {pipeline_mode = #tpu.pipeline_mode<synchronous>, transform_indices = @transform_5, window_bounds = array<i64: 256, 128>}]} {
    %c0 = arith.constant 0 : index
    %c0_0 = arith.constant 0 : index
    %0 = vector.load %arg1[%c0, %c0_0] : memref<256x256xbf16, #tpu.memory_space<vmem>>, vector<256x256xbf16>
    %c0_1 = arith.constant 0 : index
    %c0_2 = arith.constant 0 : index
    %1 = vector.load %arg2[%c0_1, %c0_2] : memref<256x128xbf16, #tpu.memory_space<vmem>>, vector<256x128xbf16>
    %cst = arith.constant dense<0.000000e+00> : vector<256x128xf32>
    %2 = tpu.matmul %0, %1, %cst {dimension_numbers = #tpu.dot_dimension_numbers<[1], [0], [0], [1], [0, 0, 1, 1], [], []>} : vector<256x256xbf16>, vector<256x128xbf16>, vector<256x128xf32> -> vector<256x128xf32>
    %3 = tpu.iota {dimensions = array<i32: 1>} : vector<256x128xi32>
    %c32_i32 = arith.constant 32 : i32
    %4 = vector.broadcast %c32_i32 : i32 to vector<256x128xi32>
    %5 = arith.cmpi slt, %3, %4 : vector<256x128xi32>
    %c0_3 = arith.constant 0 : index
    %c0_4 = arith.constant 0 : index
    %6 = vector.load %arg3[%c0_3, %c0_4] : memref<1x128xf32, #tpu.memory_space<vmem>>, vector<1x128xf32>
    %7 = vector.broadcast %6 : vector<1x128xf32> to vector<256x128xf32>
    %8 = arith.addf %2, %7 : vector<256x128xf32>
    %cst_5 = arith.constant 0.000000e+00 : f32
    %9 = vector.broadcast %cst_5 : f32 to vector<256x128xf32>
    %10 = arith.maximumf %8, %9 : vector<256x128xf32>
    %11 = arith.select %5, %2, %10 : vector<256x128xi1>, vector<256x128xf32>
    %12 = arith.truncf %11 : vector<256x128xf32> to vector<256x128xbf16>
    %c0_6 = arith.constant 0 : index
    %c0_7 = arith.constant 0 : index
    %13 = vector.load %arg4[%c0_6, %c0_7] : memref<128x128xbf16, #tpu.memory_space<vmem>>, vector<128x128xbf16>
    %cst_8 = arith.constant dense<0.000000e+00> : vector<256x128xf32>
    %14 = tpu.matmul %12, %13, %cst_8 {dimension_numbers = #tpu.dot_dimension_numbers<[1], [0], [0], [1], [0, 0, 1, 1], [], []>} : vector<256x128xbf16>, vector<128x128xbf16>, vector<256x128xf32> -> vector<256x128xf32>
    %c0_9 = arith.constant 0 : index
    %c0_10 = arith.constant 0 : index
    %15 = vector.load %arg1[%c0_9, %c0_10] : memref<256x256xbf16, #tpu.memory_space<vmem>>, vector<256x256xbf16>
    %16 = arith.truncf %14 : vector<256x128xf32> to vector<256x128xbf16>
    %cst_11 = arith.constant dense<0.000000e+00> : vector<256x128xf32>
    %17 = tpu.matmul %15, %16, %cst_11 {dimension_numbers = #tpu.dot_dimension_numbers<[1], [0], [0], [1], [0, 0, 1, 1], [], []>} : vector<256x256xbf16>, vector<256x128xbf16>, vector<256x128xf32> -> vector<256x128xf32>
    %c0_12 = arith.constant 0 : index
    %c0_13 = arith.constant 0 : index
    %18 = vector.load %arg5[%c0_12, %c0_13] : memref<1x128xf32, #tpu.memory_space<vmem>>, vector<1x128xf32>
    %19 = vector.broadcast %18 : vector<1x128xf32> to vector<256x128xf32>
    %20 = arith.addf %17, %19 : vector<256x128xf32>
    %21 = tpu.iota {dimensions = array<i32: 1>} : vector<256x128xi32>
    %c4_i32 = arith.constant 4 : i32
    %22 = vector.broadcast %c4_i32 : i32 to vector<256x128xi32>
    %23 = arith.cmpi slt, %21, %22 : vector<256x128xi32>
    %cst_14 = arith.constant -1.000000e+30 : f32
    %24 = vector.broadcast %cst_14 : f32 to vector<256x128xf32>
    %25 = arith.select %23, %20, %24 : vector<256x128xi1>, vector<256x128xf32>
    %cst_15 = arith.constant dense<0xFF800000> : vector<256xf32>
    %26 = vector.multi_reduction <maximumf>, %25, %cst_15 [1] : vector<256x128xf32> to vector<256xf32>
    %27 = vector.shape_cast %26 : vector<256xf32> to vector<256x1xf32>
    %28 = vector.broadcast %27 : vector<256x1xf32> to vector<256x128xf32>
    %29 = arith.subf %25, %28 : vector<256x128xf32>
    %30 = math.exp %29 : vector<256x128xf32>
    %cst_16 = arith.constant dense<0.000000e+00> : vector<256xf32>
    %31 = vector.multi_reduction <add>, %30, %cst_16 [1] : vector<256x128xf32> to vector<256xf32>
    %32 = vector.shape_cast %31 : vector<256xf32> to vector<256x1xf32>
    %33 = math.log %32 : vector<256x1xf32>
    %34 = arith.addf %33, %27 : vector<256x1xf32>
    %35 = vector.broadcast %34 : vector<256x1xf32> to vector<256x128xf32>
    %36 = arith.subf %25, %35 : vector<256x128xf32>
    %c0_17 = arith.constant 0 : index
    %c0_18 = arith.constant 0 : index
    %37 = vector.load %arg6[%c0_17, %c0_18] : memref<256x128xf32, #tpu.memory_space<vmem>>, vector<256x128xf32>
    tpu.vector_store %arg6[%c0_17, %c0_18], %36 {strides = array<i32>} : memref<256x128xf32, #tpu.memory_space<vmem>>, vector<256x128xf32>,
    return
  }
  func.func @transform_0(%arg0: i32) -> (i32, i32) {
    %c0_i32 = arith.constant 0 : i32
    %c0_i32_0 = arith.constant 0 : i32
    %c0_i32_1 = arith.constant 0 : i32
    return %c0_i32, %c0_i32_0 : i32, i32
  }
  func.func @transform_1(%arg0: i32) -> (i32, i32) {
    %c0_i32 = arith.constant 0 : i32
    %c0_i32_0 = arith.constant 0 : i32
    %c0_i32_1 = arith.constant 0 : i32
    return %c0_i32, %c0_i32_0 : i32, i32
  }
  func.func @transform_2(%arg0: i32) -> (i32, i32) {
    %c0_i32 = arith.constant 0 : i32
    %c0_i32_0 = arith.constant 0 : i32
    %c0_i32_1 = arith.constant 0 : i32
    return %c0_i32, %c0_i32_0 : i32, i32
  }
  func.func @transform_3(%arg0: i32) -> (i32, i32) {
    %c0_i32 = arith.constant 0 : i32
    %c0_i32_0 = arith.constant 0 : i32
    %c0_i32_1 = arith.constant 0 : i32
    return %c0_i32, %c0_i32_0 : i32, i32
  }
  func.func @transform_4(%arg0: i32) -> (i32, i32) {
    %c0_i32 = arith.constant 0 : i32
    %c0_i32_0 = arith.constant 0 : i32
    %c0_i32_1 = arith.constant 0 : i32
    return %c0_i32, %c0_i32_0 : i32, i32
  }
  func.func @transform_5(%arg0: i32) -> (i32, i32) {
    %c0_i32 = arith.constant 0 : i32
    %c0_i32_0 = arith.constant 0 : i32
    %c0_i32_1 = arith.constant 0 : i32
    return %c0_i32, %c0_i32_0 : i32, i32
  }
}

</mosaic_0001>

<llo_original>
// kernel: step_model_forward.1
$region0: #{step_model_forward.1}
  #allocation0 [shape = 'u32[]', space=smem, size = 0x4, offset = 0x4, fixed_abs, tag = 'smem constant byte address 0x4 - core index']
  #allocation1 [shape = 'u32[144,128]{1,0:T(1,128)}', space=vmem, size = 0x12000, scoped, tag = 'internal scratch']
  %s0 = inlined_call_operand.vmem [shape: bf16[256,256], index: 0, kind: input, shape index: {}]
  %s1 = inlined_call_operand.vmem [shape: bf16[256,128], index: 1, kind: input, shape index: {}]
  %s2 = inlined_call_operand.vmem [shape: f32[1,128], index: 2, kind: input, shape index: {}]
  %s3 = inlined_call_operand.vmem [shape: bf16[128,128], index: 3, kind: input, shape index: {}]
  %s4 = inlined_call_operand.vmem [shape: f32[1,128], index: 4, kind: input, shape index: {}]
  %s5 = inlined_call_operand.vmem [shape: f32[256,128], index: 5, kind: output, shape index: {}]
  %s6 = sld [smem:[#allocation0]]
  $region30: #{step_model_forward.1} parent=0
    _
  %s8 = ssub.s32 1, %s6
  %s9 = scalar_select 0, %s8, %s6
  // Predicated region
  $region2: #{step_model_forward.1} parent=0 // pred_check
    _
  $region3: #{step_model_forward.1} parent=0 // pred_check_branch
    %11 = sbr.rel (0) target = $region5
  $region4: #{step_model_forward.1} parent=0 // pred_region
    _
  $region5: #{step_model_forward.1} parent=0 // pred_fallthru
    _
  // Predicated region
  $region6: #{step_model_forward.1} parent=0 // pred_check
    _
  $region7: #{step_model_forward.1} parent=0 // pred_check_branch
    %13 = sbr.rel (0) target = $region9
  $region8: #{step_model_forward.1} parent=0 // pred_region
    _
  $region9: #{step_model_forward.1} parent=0 // pred_fallthru
    _
  // Predicated region
  $region10: #{step_model_forward.1} parent=0 // pred_check
    _
  $region11: #{step_model_forward.1} parent=0 // pred_check_branch
    %15 = sbr.rel (0) target = $region13
  $region12: #{step_model_forward.1} parent=0 // pred_region
    _
  $region13: #{step_model_forward.1} parent=0 // pred_fallthru
    _
  // Predicated region
  $region14: #{step_model_forward.1} parent=0 // pred_check
    _
  $region15: #{step_model_forward.1} parent=0 // pred_check_branch
    %17 = sbr.rel (0) target = $region17
  $region16: #{step_model_forward.1} parent=0 // pred_region
    _
  $region17: #{step_model_forward.1} parent=0 // pred_fallthru
    _
  // Predicated region
  $region18: #{step_model_forward.1} parent=0 // pred_check
    _
  $region19: #{step_model_forward.1} parent=0 // pred_check_branch
    %19 = sbr.rel (0) target = $region21
  $region20: #{step_model_forward.1} parent=0 // pred_region
    _
  $region21: #{step_model_forward.1} parent=0 // pred_fallthru
    _
  %v21 = vld [vmem:[%s0] sm:$0xff]
  %v22 = vld [vmem:[%s0 + $0x8] sm:$0xff]
  %v23 = vld [vmem:[%s0 + $0x10] sm:$0xff]
  %v24 = vld [vmem:[%s0 + $0x18] sm:$0xff]
  %v25 = vld [vmem:[%s0 + $0x20] sm:$0xff]
  %v26 = vld [vmem:[%s0 + $0x28] sm:$0xff]
  %v27 = vld [vmem:[%s0 + $0x30] sm:$0xff]
  %v28 = vld [vmem:[%s0 + $0x38] sm:$0xff]
  %v29 = vld [vmem:[%s0 + $0x40] sm:$0xff]
  %v30 = vld [vmem:[%s0 + $0x48] sm:$0xff]
  %v31 = vld [vmem:[%s0 + $0x50] sm:$0xff]
  %v32 = vld [vmem:[%s0 + $0x58] sm:$0xff]
  %v33 = vld [vmem:[%s0 + $0x60] sm:$0xff]
  %v34 = vld [vmem:[%s0 + $0x68] sm:$0xff]
  %v35 = vld [vmem:[%s0 + $0x70] sm:$0xff]
  %v36 = vld [vmem:[%s0 + $0x78] sm:$0xff]
  %v37 = vld [vmem:[%s0 + $0x80] sm:$0xff]
  %v38 = vld [vmem:[%s0 + $0x88] sm:$0xff]
  %v39 = vld [vmem:[%s0 + $0x90] sm:$0xff]
  %v40 = vld [vmem:[%s0 + $0x98] sm:$0xff]
  %v41 = vld [vmem:[%s0 + $0xa0] sm:$0xff]
  %v42 = vld [vmem:[%s0 + $0xa8] sm:$0xff]
  %v43 = vld [vmem:[%s0 + $0xb0] sm:$0xff]
  %v44 = vld [vmem:[%s0 + $0xb8] sm:$0xff]
  %v45 = vld [vmem:[%s0 + $0xc0] sm:$0xff]
  %v46 = vld [vmem:[%s0 + $0xc8] sm:$0xff]
  %v47 = vld [vmem:[%s0 + $0xd0] sm:$0xff]
  %v48 = vld [vmem:[%s0 + $0xd8] sm:$0xff]
  %v49 = vld [vmem:[%s0 + $0xe0] sm:$0xff]
  %v50 = vld [vmem:[%s0 + $0xe8] sm:$0xff]
  %v51 = vld [vmem:[%s0 + $0xf0] sm:$0xff]
  %v52 = vld [vmem:[%s0 + $0xf8] sm:$0xff]
  %v53 = vld [vmem:[%s1] sm:$0xf]
  %v54 = vld [vmem:[%s1 + $0x4] sm:$0xf]
  %v55 = vld [vmem:[%s1 + $0x8] sm:$0xf]
  %v56 = vld [vmem:[%s1 + $0xc] sm:$0xf]
  %v57 = vld [vmem:[%s1 + $0x10] sm:$0xf]
  %v58 = vld [vmem:[%s1 + $0x14] sm:$0xf]
  %v59 = vld [vmem:[%s1 + $0x18] sm:$0xf]
  %v60 = vld [vmem:[%s1 + $0x1c] sm:$0xf]
  %v61 = vld [vmem:[%s1 + $0x20] sm:$0xf]
  %v62 = vld [vmem:[%s1 + $0x24] sm:$0xf]
  %v63 = vld [vmem:[%s1 + $0x28] sm:$0xf]
  %v64 = vld [vmem:[%s1 + $0x2c] sm:$0xf]
  %v65 = vld [vmem:[%s1 + $0x30] sm:$0xf]
  %v66 = vld [vmem:[%s1 + $0x34] sm:$0xf]
  %v67 = vld [vmem:[%s1 + $0x38] sm:$0xf]
  %v68 = vld [vmem:[%s1 + $0x3c] sm:$0xf]
  %v69 = vld [vmem:[%s1 + $0x40] sm:$0xf]
  %v70 = vld [vmem:[%s1 + $0x44] sm:$0xf]
  %v71 = vld [vmem:[%s1 + $0x48] sm:$0xf]
  %v72 = vld [vmem:[%s1 + $0x4c] sm:$0xf]
  %v73 = vld [vmem:[%s1 + $0x50] sm:$0xf]
  %v74 = vld [vmem:[%s1 + $0x54] sm:$0xf]
  %v75 = vld [vmem:[%s1 + $0x58] sm:$0xf]
  %v76 = vld [vmem:[%s1 + $0x5c] sm:$0xf]
  %v77 = vld [vmem:[%s1 + $0x60] sm:$0xf]
  %v78 = vld [vmem:[%s1 + $0x64] sm:$0xf]
  %v79 = vld [vmem:[%s1 + $0x68] sm:$0xf]
  %v80 = vld [vmem:[%s1 + $0x6c] sm:$0xf]
  %v81 = vld [vmem:[%s1 + $0x70] sm:$0xf]
  %v82 = vld [vmem:[%s1 + $0x74] sm:$0xf]
  %v83 = vld [vmem:[%s1 + $0x78] sm:$0xf]
  %v84 = vld [vmem:[%s1 + $0x7c] sm:$0xf]
  %v117 = vunpack.c.l.b16 %v21
  %v118 = vunpack.c.h.b16 %v21
  %v119 = vunpack.c.l.b16 %v22
  %v120 = vunpack.c.h.b16 %v22
  %v121 = vunpack.c.l.b16 %v23
  %v122 = vunpack.c.h.b16 %v23
  %v123 = vunpack.c.l.b16 %v24
  %v124 = vunpack.c.h.b16 %v24
  %v125 = vunpack.c.l.b16 %v25
  %v126 = vunpack.c.h.b16 %v25
  %v127 = vunpack.c.l.b16 %v26
  %v128 = vunpack.c.h.b16 %v26
  %v129 = vunpack.c.l.b16 %v27
  %v130 = vunpack.c.h.b16 %v27
  %v131 = vunpack.c.l.b16 %v28
  %v132 = vunpack.c.h.b16 %v28
  %v133 = vunpack.c.l.b16 %v29
  %v134 = vunpack.c.h.b16 %v29
  %v135 = vunpack.c.l.b16 %v30
  %v136 = vunpack.c.h.b16 %v30
  %v137 = vunpack.c.l.b16 %v31
  %v138 = vunpack.c.h.b16 %v31
  %v139 = vunpack.c.l.b16 %v32
  %v140 = vunpack.c.h.b16 %v32
  %v141 = vunpack.c.l.b16 %v33
  %v142 = vunpack.c.h.b16 %v33
  %v143 = vunpack.c.l.b16 %v34
  %v144 = vunpack.c.h.b16 %v34
  %v145 = vunpack.c.l.b16 %v35
  %v146 = vunpack.c.h.b16 %v35
  %v147 = vunpack.c.l.b16 %v36
  %v148 = vunpack.c.h.b16 %v36
  %v149 = vunpack.c.l.b16 %v37
  %v150 = vunpack.c.h.b16 %v37
  %v151 = vunpack.c.l.b16 %v38
  %v152 = vunpack.c.h.b16 %v38
  %v153 = vunpack.c.l.b16 %v39
  %v154 = vunpack.c.h.b16 %v39
  %v155 = vunpack.c.l.b16 %v40
  %v156 = vunpack.c.h.b16 %v40
  %v157 = vunpack.c.l.b16 %v41
  %v158 = vunpack.c.h.b16 %v41
  %v159 = vunpack.c.l.b16 %v42
  %v160 = vunpack.c.h.b16 %v42
  %v161 = vunpack.c.l.b16 %v43
  %v162 = vunpack.c.h.b16 %v43
  %v163 = vunpack.c.l.b16 %v44
  %v164 = vunpack.c.h.b16 %v44
  %v165 = vunpack.c.l.b16 %v45
  %v166 = vunpack.c.h.b16 %v45
  %v167 = vunpack.c.l.b16 %v46
  %v168 = vunpack.c.h.b16 %v46
  %v169 = vunpack.c.l.b16 %v47
  %v170 = vunpack.c.h.b16 %v47
  %v171 = vunpack.c.l.b16 %v48
  %v172 = vunpack.c.h.b16 %v48
  %v173 = vunpack.c.l.b16 %v49
  %v174 = vunpack.c.h.b16 %v49
  %v175 = vunpack.c.l.b16 %v50
  %v176 = vunpack.c.h.b16 %v50
  %v177 = vunpack.c.l.b16 %v51
  %v178 = vunpack.c.h.b16 %v51
  %v179 = vunpack.c.l.b16 %v52
  %v180 = vunpack.c.h.b16 %v52
  %v181 = vpack.c.b16 %v119, %v117
  %v182 = vpack.c.b16 %v120, %v118
  %v183 = vpack.c.b16 %v123, %v121
  %v184 = vpack.c.b16 %v124, %v122
  %v185 = vpack.c.b16 %v127, %v125
  %v186 = vpack.c.b16 %v128, %v126
  %v187 = vpack.c.b16 %v131, %v129
  %v188 = vpack.c.b16 %v132, %v130
  %v189 = vpack.c.b16 %v135, %v133
  %v190 = vpack.c.b16 %v136, %v134
  %v191 = vpack.c.b16 %v139, %v137
  %v192 = vpack.c.b16 %v140, %v138
  %v193 = vpack.c.b16 %v143, %v141
  %v194 = vpack.c.b16 %v144, %v142
  %v195 = vpack.c.b16 %v147, %v145
  %v196 = vpack.c.b16 %v148, %v146
  %v197 = vpack.c.b16 %v151, %v149
  %v198 = vpack.c.b16 %v152, %v150
  %v199 = vpack.c.b16 %v155, %v153
  %v200 = vpack.c.b16 %v156, %v154
  %v201 = vpack.c.b16 %v159, %v157
  %v202 = vpack.c.b16 %v160, %v158
  %v203 = vpack.c.b16 %v163, %v161
  %v204 = vpack.c.b16 %v164, %v162
  %v205 = vpack.c.b16 %v167, %v165
  %v206 = vpack.c.b16 %v168, %v166
  %v207 = vpack.c.b16 %v171, %v169
  %v208 = vpack.c.b16 %v172, %v170
  %v209 = vpack.c.b16 %v175, %v173
  %v210 = vpack.c.b16 %v176, %v174
  %v211 = vpack.c.b16 %v179, %v177
  %v212 = vpack.c.b16 %v180, %v178
  %v277 = vunpack.c.l.b16 %v53
  %v278 = vunpack.c.l.b16 %v54
  %v279 = vunpack.c.l.b16 %v55
  %v280 = vunpack.c.l.b16 %v56
  %v281 = vunpack.c.l.b16 %v57
  %v282 = vunpack.c.l.b16 %v58
  %v283 = vunpack.c.l.b16 %v59
  %v284 = vunpack.c.l.b16 %v60
  %v285 = vunpack.c.l.b16 %v61
  %v286 = vunpack.c.l.b16 %v62
  %v287 = vunpack.c.l.b16 %v63
  %v288 = vunpack.c.l.b16 %v64
  %v289 = vunpack.c.l.b16 %v65
  %v290 = vunpack.c.l.b16 %v66
  %v291 = vunpack.c.l.b16 %v67
  %v292 = vunpack.c.l.b16 %v68
  %v293 = vunpack.c.l.b16 %v69
  %v294 = vunpack.c.l.b16 %v70
  %v295 = vunpack.c.l.b16 %v71
  %v296 = vunpack.c.l.b16 %v72
  %v297 = vunpack.c.l.b16 %v73
  %v298 = vunpack.c.l.b16 %v74
  %v299 = vunpack.c.l.b16 %v75
  %v300 = vunpack.c.l.b16 %v76
  %v301 = vunpack.c.l.b16 %v77
  %v302 = vunpack.c.l.b16 %v78
  %v303 = vunpack.c.l.b16 %v79
  %v304 = vunpack.c.l.b16 %v80
  %v305 = vunpack.c.l.b16 %v81
  %v306 = vunpack.c.l.b16 %v82
  %v307 = vunpack.c.l.b16 %v83
  %v308 = vunpack.c.l.b16 %v84
  %v309 = vpack.c.b16 %v278, %v277
  %v310 = vpack.c.b16 %v280, %v279
  %v311 = vpack.c.b16 %v282, %v281
  %v312 = vpack.c.b16 %v284, %v283
  %v313 = vpack.c.b16 %v286, %v285
  %v314 = vpack.c.b16 %v288, %v287
  %v315 = vpack.c.b16 %v290, %v289
  %v316 = vpack.c.b16 %v292, %v291
  %v317 = vpack.c.b16 %v294, %v293
  %v318 = vpack.c.b16 %v296, %v295
  %v319 = vpack.c.b16 %v298, %v297
  %v320 = vpack.c.b16 %v300, %v299
  %v321 = vpack.c.b16 %v302, %v301
  %v322 = vpack.c.b16 %v304, %v303
  %v323 = vpack.c.b16 %v306, %v305
  %v324 = vpack.c.b16 %v308, %v307
  %341 = vmatprep.subr.bf16.mxu0 0
  %342 = vmatpush1.bf16.msra.mxu0 %v309
  %343 = vmatprep.subr.bf16.mxu0 0
  %344 = vmatpush1.bf16.msra.mxu0 %v310
  %345 = vmatprep.subr.bf16.mxu0 0
  %346 = vmatpush1.bf16.msra.mxu0 %v311
  %347 = vmatprep.subr.bf16.mxu0 0
  %348 = vmatpush1.bf16.msra.mxu0 %v312
  %349 = vmatprep.subr.bf16.mxu0 0
  %350 = vmatpush1.bf16.msra.mxu0 %v313
  %351 = vmatprep.subr.bf16.mxu0 0
  %352 = vmatpush1.bf16.msra.mxu0 %v314
  %353 = vmatprep.subr.bf16.mxu0 0
  %354 = vmatpush1.bf16.msra.mxu0 %v315
  %355 = vmatprep.subr.bf16.mxu0 0
  %356 = vmatpush1.bf16.msra.mxu0 %v316
  %357 = vmatprep.subr.bf16.mxu0 0
  %358 = vmatpush1.bf16.msra.mxu0 %v317
  %359 = vmatprep.subr.bf16.mxu0 0
  %360 = vmatpush1.bf16.msra.mxu0 %v318
  %361 = vmatprep.subr.bf16.mxu0 0
  %362 = vmatpush1.bf16.msra.mxu0 %v319
  %363 = vmatprep.subr.bf16.mxu0 0
  %364 = vmatpush1.bf16.msra.mxu0 %v320
  %365 = vmatprep.subr.bf16.mxu0 0
  %366 = vmatpush1.bf16.msra.mxu0 %v321
  %367 = vmatprep.subr.bf16.mxu0 0
  %368 = vmatpush1.bf16.msra.mxu0 %v322
  %369 = vmatprep.subr.bf16.mxu0 0
  %370 = vmatpush1.bf16.msra.mxu0 %v323
  %371 = vmatprep.subr.bf16.mxu0 0
  %372 = vmatpush1.bf16.msra.mxu0 %v324
  %373 = vmatprep.mubr.bf16.mxu0 %v182
  %374 = vmatmul.mubr.bf16.gmra.mrb[0].mxu0 %v181
  %v375 = vpop.f32.mrb[0].mxu0
  %v376 = vadd.f32 0.0, %v375
  %v377 = vpop.f32.mrb[0].mxu0
  %v378 = vpop.f32.mrb[0].mxu0
  %v379 = vadd.f32 0.0, %v378
  %v380 = vpop.f32.mrb[0].mxu0
  %381 = vmatprep.mubr.bf16.mxu0 %v184
  %382 = vmatmul.mubr.bf16.gmra.mrb[0].mxu0 %v183
  %v383 = vpop.f32.mrb[0].mxu0
  %v384 = vadd.f32 0.0, %v383
  %v385 = vpop.f32.mrb[0].mxu0
  %v386 = vpop.f32.mrb[0].mxu0
  %v387 = vadd.f32 0.0, %v386
  %v388 = vpop.f32.mrb[0].mxu0
  %389 = vmatprep.mubr.bf16.mxu0 %v186
  %390 = vmatmul.mubr.bf16.gmra.mrb[0].mxu0 %v185
  %v391 = vpop.f32.mrb[0].mxu0
  %v392 = vadd.f32 0.0, %v391
  %v393 = vpop.f32.mrb[0].mxu0
  %v394 = vpop.f32.mrb[0].mxu0
  %v395 = vadd.f32 0.0, %v394
  %v396 = vpop.f32.mrb[0].mxu0
  %397 = vmatprep.mubr.bf16.mxu0 %v188
  %398 = vmatmul.mubr.bf16.gmra.mrb[0].mxu0 %v187
  %v399 = vpop.f32.mrb[0].mxu0
  %v400 = vadd.f32 0.0, %v399
  %v401 = vpop.f32.mrb[0].mxu0
  %v402 = vpop.f32.mrb[0].mxu0
  %v403 = vadd.f32 0.0, %v402
  %v404 = vpop.f32.mrb[0].mxu0
  %405 = vmatprep.mubr.bf16.mxu0 %v190
  %406 = vmatmul.mubr.bf16.gmra.mrb[0].mxu0 %v189
  %v407 = vpop.f32.mrb[0].mxu0
  %v408 = vadd.f32 0.0, %v407
  %v409 = vpop.f32.mrb[0].mxu0
  %v410 = vpop.f32.mrb[0].mxu0
  %v411 = vadd.f32 0.0, %v410
  %v412 = vpop.f32.mrb[0].mxu0
  %413 = vmatprep.mubr.bf16.mxu0 %v192
  %414 = vmatmul.mubr.bf16.gmra.mrb[0].mxu0 %v191
  %v415 = vpop.f32.mrb[0].mxu0
  %v416 = vadd.f32 0.0, %v415
  %v417 = vpop.f32.mrb[0].mxu0
  %v418 = vpop.f32.mrb[0].mxu0
  %v419 = vadd.f32 0.0, %v418
  %v420 = vpop.f32.mrb[0].mxu0
  %421 = vmatprep.mubr.bf16.mxu0 %v194
  %422 = vmatmul.mubr.bf16.gmra.mrb[0].mxu0 %v193
  %v423 = vpop.f32.mrb[0].mxu0
  %v424 = vadd.f32 0.0, %v423
  %v425 = vpop.f32.mrb[0].mxu0
  %v426 = vpop.f32.mrb[0].mxu0
  %v427 = vadd.f32 0.0, %v426
  %v428 = vpop.f32.mrb[0].mxu0
  %429 = vmatprep.mubr.bf16.mxu0 %v196
  %430 = vmatmul.mubr.bf16.gmra.mrb[0].mxu0 %v195
  %v431 = vpop.f32.mrb[0].mxu0
  %v432 = vadd.f32 0.0, %v431
  %v433 = vpop.f32.mrb[0].mxu0
  %v434 = vpop.f32.mrb[0].mxu0
  %v435 = vadd.f32 0.0, %v434
  %v436 = vpop.f32.mrb[0].mxu0
  %437 = vmatprep.mubr.bf16.mxu0 %v198
  %438 = vmatmul.mubr.bf16.gmra.mrb[0].mxu0 %v197
  %v439 = vpop.f32.mrb[0].mxu0
  %v440 = vadd.f32 0.0, %v439
  %v441 = vpop.f32.mrb[0].mxu0
  %v442 = vpop.f32.mrb[0].mxu0
  %v443 = vadd.f32 0.0, %v442
  %v444 = vpop.f32.mrb[0].mxu0
  %445 = vmatprep.mubr.bf16.mxu0 %v200
  %446 = vmatmul.mubr.bf16.gmra.mrb[0].mxu0 %v199
  %v447 = vpop.f32.mrb[0].mxu0
  %v448 = vadd.f32 0.0, %v447
  %v449 = vpop.f32.mrb[0].mxu0
  %v450 = vpop.f32.mrb[0].mxu0
  %v451 = vadd.f32 0.0, %v450
  %v452 = vpop.f32.mrb[0].mxu0
  %453 = vmatprep.mubr.bf16.mxu0 %v202
  %454 = vmatmul.mubr.bf16.gmra.mrb[0].mxu0 %v201
  %v455 = vpop.f32.mrb[0].mxu0
  %v456 = vadd.f32 0.0, %v455
  %v457 = vpop.f32.mrb[0].mxu0
  %v458 = vpop.f32.mrb[0].mxu0
  %v459 = vadd.f32 0.0, %v458
  %v460 = vpop.f32.mrb[0].mxu0
  %461 = vmatprep.mubr.bf16.mxu0 %v204
  %462 = vmatmul.mubr.bf16.gmra.mrb[0].mxu0 %v203
  %v463 = vpop.f32.mrb[0].mxu0
  %v464 = vadd.f32 0.0, %v463
  %v465 = vpop.f32.mrb[0].mxu0
  %v466 = vpop.f32.mrb[0].mxu0
  %v467 = vadd.f32 0.0, %v466
  %v468 = vpop.f32.mrb[0].mxu0
  %469 = vmatprep.mubr.bf16.mxu0 %v206
  %470 = vmatmul.mubr.bf16.gmra.mrb[0].mxu0 %v205
  %v471 = vpop.f32.mrb[0].mxu0
  %v472 = vadd.f32 0.0, %v471
  %v473 = vpop.f32.mrb[0].mxu0
  %v474 = vpop.f32.mrb[0].mxu0
  %v475 = vadd.f32 0.0, %v474
  %v476 = vpop.f32.mrb[0].mxu0
  %477 = vmatprep.mubr.bf16.mxu0 %v208
  %478 = vmatmul.mubr.bf16.gmra.mrb[0].mxu0 %v207
  %v479 = vpop.f32.mrb[0].mxu0
  %v480 = vadd.f32 0.0, %v479
  %v481 = vpop.f32.mrb[0].mxu0
  %v482 = vpop.f32.mrb[0].mxu0
  %v483 = vadd.f32 0.0, %v482
  %v484 = vpop.f32.mrb[0].mxu0
  %485 = vmatprep.mubr.bf16.mxu0 %v210
  %486 = vmatmul.mubr.bf16.gmra.mrb[0].mxu0 %v209
  %v487 = vpop.f32.mrb[0].mxu0
  %v488 = vadd.f32 0.0, %v487
  %v489 = vpop.f32.mrb[0].mxu0
  %v490 = vpop.f32.mrb[0].mxu0
  %v491 = vadd.f32 0.0, %v490
  %v492 = vpop.f32.mrb[0].mxu0
  %493 = vmatprep.mubr.bf16.mxu0 %v212
  %494 = vmatmul.mubr.bf16.gmra.mrb[0].mxu0 %v211
  %v495 = vpop.f32.mrb[0].mxu0
  %v496 = vadd.f32 0.0, %v495
  %v497 = vpop.f32.mrb[0].mxu0
  %v498 = vpop.f32.mrb[0].mxu0
  %v499 = vadd.f32 0.0, %v498
  %v500 = vpop.f32.mrb[0].mxu0
  %501 = vdwg.mxu0
  %v502 = vlaneseq
  %v503 = vand.u32 %v502, 127
  %vm504 = vcmp.lt.s32.totalorder %v503, 32
  %v505 = vld [vmem:[%s2] sm:$0x1]
  %v507 = vlaneseq
  %v508 = vshrl.u32 %v507, 7
  %v509 = vsub.s32 0, %v508
  %v510 = vrot.slane %v505, %v509
  %v512 = vadd.f32 %v376, %v510
  %v513 = vadd.f32 %v379, %v510
  %v514 = vadd.f32 %v384, %v510
  %v515 = vadd.f32 %v387, %v510
  %v516 = vadd.f32 %v392, %v510
  %v517 = vadd.f32 %v395, %v510
  %v518 = vadd.f32 %v400, %v510
  %v519 = vadd.f32 %v403, %v510
  %v520 = vadd.f32 %v408, %v510
  %v521 = vadd.f32 %v411, %v510
  %v522 = vadd.f32 %v416, %v510
  %v523 = vadd.f32 %v419, %v510
  %v524 = vadd.f32 %v424, %v510
  %v525 = vadd.f32 %v427, %v510
  %v526 = vadd.f32 %v432, %v510
  %v527 = vadd.f32 %v435, %v510
  %v528 = vadd.f32 %v440, %v510
  %v529 = vadd.f32 %v443, %v510
  %v530 = vadd.f32 %v448, %v510
  %v531 = vadd.f32 %v451, %v510
  %v532 = vadd.f32 %v456, %v510
  %v533 = vadd.f32 %v459, %v510
  %v534 = vadd.f32 %v464, %v510
  %v535 = vadd.f32 %v467, %v510
  %v536 = vadd.f32 %v472, %v510
  %v537 = vadd.f32 %v475, %v510
  %v538 = vadd.f32 %v480, %v510
  %v539 = vadd.f32 %v483, %v510
  %v540 = vadd.f32 %v488, %v510
  %v541 = vadd.f32 %v491, %v510
  %v542 = vadd.f32 %v496, %v510
  %v543 = vadd.f32 %v499, %v510
  %v544 = vmax.f32 %v512, 0.0
  %v545 = vmax.f32 %v513, 0.0
  %v546 = vmax.f32 %v514, 0.0
  %v547 = vmax.f32 %v515, 0.0
  %v548 = vmax.f32 %v516, 0.0
  %v549 = vmax.f32 %v517, 0.0
  %v550 = vmax.f32 %v518, 0.0
  %v551 = vmax.f32 %v519, 0.0
  %v552 = vmax.f32 %v520, 0.0
  %v553 = vmax.f32 %v521, 0.0
  %v554 = vmax.f32 %v522, 0.0
  %v555 = vmax.f32 %v523, 0.0
  %v556 = vmax.f32 %v524, 0.0
  %v557 = vmax.f32 %v525, 0.0
  %v558 = vmax.f32 %v526, 0.0
  %v559 = vmax.f32 %v527, 0.0
  %v560 = vmax.f32 %v528, 0.0
  %v561 = vmax.f32 %v529, 0.0
  %v562 = vmax.f32 %v530, 0.0
  %v563 = vmax.f32 %v531, 0.0
  %v564 = vmax.f32 %v532, 0.0
  %v565 = vmax.f32 %v533, 0.0
  %v566 = vmax.f32 %v534, 0.0
  %v567 = vmax.f32 %v535, 0.0
  %v568 = vmax.f32 %v536, 0.0
  %v569 = vmax.f32 %v537, 0.0
  %v570 = vmax.f32 %v538, 0.0
  %v571 = vmax.f32 %v539, 0.0
  %v572 = vmax.f32 %v540, 0.0
  %v573 = vmax.f32 %v541, 0.0
  %v574 = vmax.f32 %v542, 0.0
  %v575 = vmax.f32 %v543, 0.0
  %v576 = vsel %vm504, %v376, %v544
  %v577 = vsel %vm504, %v379, %v545
  %v578 = vsel %vm504, %v384, %v546
  %v579 = vsel %vm504, %v387, %v547
  %v580 = vsel %vm504, %v392, %v548
  %v581 = vsel %vm504, %v395, %v549
  %v582 = vsel %vm504, %v400, %v550
  %v583 = vsel %vm504, %v403, %v551
  %v584 = vsel %vm504, %v408, %v552
  %v585 = vsel %vm504, %v411, %v553
  %v586 = vsel %vm504, %v416, %v554
  %v587 = vsel %vm504, %v419, %v555
  %v588 = vsel %vm504, %v424, %v556
  %v589 = vsel %vm504, %v427, %v557
  %v590 = vsel %vm504, %v432, %v558
  %v591 = vsel %vm504, %v435, %v559
  %v592 = vsel %vm504, %v440, %v560
  %v593 = vsel %vm504, %v443, %v561
  %v594 = vsel %vm504, %v448, %v562
  %v595 = vsel %vm504, %v451, %v563
  %v596 = vsel %vm504, %v456, %v564
  %v597 = vsel %vm504, %v459, %v565
  %v598 = vsel %vm504, %v464, %v566
  %v599 = vsel %vm504, %v467, %v567
  %v600 = vsel %vm504, %v472, %v568
  %v601 = vsel %vm504, %v475, %v569
  %v602 = vsel %vm504, %v480, %v570
  %v603 = vsel %vm504, %v483, %v571
  %v604 = vsel %vm504, %v488, %v572
  %v605 = vsel %vm504, %v491, %v573
  %v606 = vsel %vm504, %v496, %v574
  %v607 = vsel %vm504, %v499, %v575
  %v608 = vpack.c.bf16 %v577, %v576
  %v609 = vpack.c.bf16 %v579, %v578
  %v610 = vpack.c.bf16 %v581, %v580
  %v611 = vpack.c.bf16 %v583, %v582
  %v612 = vpack.c.bf16 %v585, %v584
  %v613 = vpack.c.bf16 %v587, %v586
  %v614 = vpack.c.bf16 %v589, %v588
  %v615 = vpack.c.bf16 %v591, %v590
  %v616 = vpack.c.bf16 %v593, %v592
  %v617 = vpack.c.bf16 %v595, %v594
  %v618 = vpack.c.bf16 %v597, %v596
  %v619 = vpack.c.bf16 %v599, %v598
  %v620 = vpack.c.bf16 %v601, %v600
  %v621 = vpack.c.bf16 %v603, %v602
  %v622 = vpack.c.bf16 %v605, %v604
  %v623 = vpack.c.bf16 %v607, %v606
  %v624 = vld [vmem:[%s3] sm:$0xf]
  %v625 = vld [vmem:[%s3 + $0x4] sm:$0xf]
  %v626 = vld [vmem:[%s3 + $0x8] sm:$0xf]
  %v627 = vld [vmem:[%s3 + $0xc] sm:$0xf]
  %v628 = vld [vmem:[%s3 + $0x10] sm:$0xf]
  %v629 = vld [vmem:[%s3 + $0x14] sm:$0xf]
  %v630 = vld [vmem:[%s3 + $0x18] sm:$0xf]
  %v631 = vld [vmem:[%s3 + $0x1c] sm:$0xf]
  %v632 = vld [vmem:[%s3 + $0x20] sm:$0xf]
  %v633 = vld [vmem:[%s3 + $0x24] sm:$0xf]
  %v634 = vld [vmem:[%s3 + $0x28] sm:$0xf]
  %v635 = vld [vmem:[%s3 + $0x2c] sm:$0xf]
  %v636 = vld [vmem:[%s3 + $0x30] sm:$0xf]
  %v637 = vld [vmem:[%s3 + $0x34] sm:$0xf]
  %v638 = vld [vmem:[%s3 + $0x38] sm:$0xf]
  %v639 = vld [vmem:[%s3 + $0x3c] sm:$0xf]
  %v656 = vunpack.c.l.b16 %v624
  %v657 = vunpack.c.l.b16 %v625
  %v658 = vunpack.c.l.b16 %v626
  %v659 = vunpack.c.l.b16 %v627
  %v660 = vunpack.c.l.b16 %v628
  %v661 = vunpack.c.l.b16 %v629
  %v662 = vunpack.c.l.b16 %v630
  %v663 = vunpack.c.l.b16 %v631
  %v664 = vunpack.c.l.b16 %v632
  %v665 = vunpack.c.l.b16 %v633
  %v666 = vunpack.c.l.b16 %v634
  %v667 = vunpack.c.l.b16 %v635
  %v668 = vunpack.c.l.b16 %v636
  %v669 = vunpack.c.l.b16 %v637
  %v670 = vunpack.c.l.b16 %v638
  %v671 = vunpack.c.l.b16 %v639
  %v672 = vpack.c.b16 %v657, %v656
  %v673 = vpack.c.b16 %v659, %v658
  %v674 = vpack.c.b16 %v661, %v660
  %v675 = vpack.c.b16 %v663, %v662
  %v676 = vpack.c.b16 %v665, %v664
  %v677 = vpack.c.b16 %v667, %v666
  %v678 = vpack.c.b16 %v669, %v668
  %v679 = vpack.c.b16 %v671, %v670
  %688 = vmatprep.subr.bf16.mxu0 0
  %689 = vmatpush1.bf16.msra.mxu0 %v672
  %690 = vmatprep.subr.bf16.mxu0 0
  %691 = vmatpush1.bf16.msra.mxu0 %v673
  %692 = vmatprep.subr.bf16.mxu0 0
  %693 = vmatpush1.bf16.msra.mxu0 %v674
  %694 = vmatprep.subr.bf16.mxu0 0
  %695 = vmatpush1.bf16.msra.mxu0 %v675
  %696 = vmatprep.subr.bf16.mxu0 0
  %697 = vmatpush1.bf16.msra.mxu0 %v676
  %698 = vmatprep.subr.bf16.mxu0 0
  %699 = vmatpush1.bf16.msra.mxu0 %v677
  %700 = vmatprep.subr.bf16.mxu0 0
  %701 = vmatpush1.bf16.msra.mxu0 %v678
  %702 = vmatprep.subr.bf16.mxu0 0
  %703 = vmatpush1.bf16.msra.mxu0 %v679
  %704 = vmatprep.subr.bf16.mxu0 0
  %705 = vmatpush1.bf16.msra.mxu0 0
  %706 = vmatprep.subr.bf16.mxu0 0
  %707 = vmatpush1.bf16.msra.mxu0 0
  %708 = vmatprep.subr.bf16.mxu0 0
  %709 = vmatpush1.bf16.msra.mxu0 0
  %710 = vmatprep.subr.bf16.mxu0 0
  %711 = vmatpush1.bf16.msra.mxu0 0
  %712 = vmatprep.subr.bf16.mxu0 0
  %713 = vmatpush1.bf16.msra.mxu0 0
  %714 = vmatprep.subr.bf16.mxu0 0
  %715 = vmatpush1.bf16.msra.mxu0 0
  %716 = vmatprep.subr.bf16.mxu0 0
  %717 = vmatpush1.bf16.msra.mxu0 0
  %718 = vmatprep.subr.bf16.mxu0 0
  %719 = vmatpush1.bf16.msra.mxu0 0
  %720 = vmatprep.mubr.bf16.mxu0 0
  %721 = vmatmul.mubr.bf16.gmra.mrb[0].mxu0 %v608
  %v722 = vpop.f32.mrb[0].mxu0
  %v723 = vadd.f32 0.0, %v722
  %v724 = vpop.f32.mrb[0].mxu0
  %v725 = vpop.f32.mrb[0].mxu0
  %v726 = vadd.f32 0.0, %v725
  %v727 = vpop.f32.mrb[0].mxu0
  %728 = vmatprep.mubr.bf16.mxu0 0
  %729 = vmatmul.mubr.bf16.gmra.mrb[0].mxu0 %v609
  %v730 = vpop.f32.mrb[0].mxu0
  %v731 = vadd.f32 0.0, %v730
  %v732 = vpop.f32.mrb[0].mxu0
  %v733 = vpop.f32.mrb[0].mxu0
  %v734 = vadd.f32 0.0, %v733
  %v735 = vpop.f32.mrb[0].mxu0
  %736 = vmatprep.mubr.bf16.mxu0 0
  %737 = vmatmul.mubr.bf16.gmra.mrb[0].mxu0 %v610
  %v738 = vpop.f32.mrb[0].mxu0
  %v739 = vadd.f32 0.0, %v738
  %v740 = vpop.f32.mrb[0].mxu0
  %v741 = vpop.f32.mrb[0].mxu0
  %v742 = vadd.f32 0.0, %v741
  %v743 = vpop.f32.mrb[0].mxu0
  %744 = vmatprep.mubr.bf16.mxu0 0
  %745 = vmatmul.mubr.bf16.gmra.mrb[0].mxu0 %v611
  %v746 = vpop.f32.mrb[0].mxu0
  %v747 = vadd.f32 0.0, %v746
  %v748 = vpop.f32.mrb[0].mxu0
  %v749 = vpop.f32.mrb[0].mxu0
  %v750 = vadd.f32 0.0, %v749
  %v751 = vpop.f32.mrb[0].mxu0
  %752 = vmatprep.mubr.bf16.mxu0 0
  %753 = vmatmul.mubr.bf16.gmra.mrb[0].mxu0 %v612
  %v754 = vpop.f32.mrb[0].mxu0
  %v755 = vadd.f32 0.0, %v754
  %v756 = vpop.f32.mrb[0].mxu0
  %v757 = vpop.f32.mrb[0].mxu0
  %v758 = vadd.f32 0.0, %v757
  %v759 = vpop.f32.mrb[0].mxu0
  %760 = vmatprep.mubr.bf16.mxu0 0
  %761 = vmatmul.mubr.bf16.gmra.mrb[0].mxu0 %v613
  %v762 = vpop.f32.mrb[0].mxu0
  %v763 = vadd.f32 0.0, %v762
  %v764 = vpop.f32.mrb[0].mxu0
  %v765 = vpop.f32.mrb[0].mxu0
  %v766 = vadd.f32 0.0, %v765
  %v767 = vpop.f32.mrb[0].mxu0
  %768 = vmatprep.mubr.bf16.mxu0 0
  %769 = vmatmul.mubr.bf16.gmra.mrb[0].mxu0 %v614
  %v770 = vpop.f32.mrb[0].mxu0
  %v771 = vadd.f32 0.0, %v770
  %v772 = vpop.f32.mrb[0].mxu0
  %v773 = vpop.f32.mrb[0].mxu0
  %v774 = vadd.f32 0.0, %v773
  %v775 = vpop.f32.mrb[0].mxu0
  %776 = vmatprep.mubr.bf16.mxu0 0
  %777 = vmatmul.mubr.bf16.gmra.mrb[0].mxu0 %v615
  %v778 = vpop.f32.mrb[0].mxu0
  %v779 = vadd.f32 0.0, %v778
  %v780 = vpop.f32.mrb[0].mxu0
  %v781 = vpop.f32.mrb[0].mxu0
  %v782 = vadd.f32 0.0, %v781
  %v783 = vpop.f32.mrb[0].mxu0
  %784 = vmatprep.mubr.bf16.mxu0 0
  %785 = vmatmul.mubr.bf16.gmra.mrb[0].mxu0 %v616
  %v786 = vpop.f32.mrb[0].mxu0
  %v787 = vadd.f32 0.0, %v786
  %v788 = vpop.f32.mrb[0].mxu0
  %v789 = vpop.f32.mrb[0].mxu0
  %v790 = vadd.f32 0.0, %v789
  %v791 = vpop.f32.mrb[0].mxu0
  %792 = vmatprep.mubr.bf16.mxu0 0
  %793 = vmatmul.mubr.bf16.gmra.mrb[0].mxu0 %v617
  %v794 = vpop.f32.mrb[0].mxu0
  %v795 = vadd.f32 0.0, %v794
  %v796 = vpop.f32.mrb[0].mxu0
  %v797 = vpop.f32.mrb[0].mxu0
  %v798 = vadd.f32 0.0, %v797
  %v799 = vpop.f32.mrb[0].mxu0
  %800 = vmatprep.mubr.bf16.mxu0 0
  %801 = vmatmul.mubr.bf16.gmra.mrb[0].mxu0 %v618
  %v802 = vpop.f32.mrb[0].mxu0
  %v803 = vadd.f32 0.0, %v802
  %v804 = vpop.f32.mrb[0].mxu0
  %v805 = vpop.f32.mrb[0].mxu0
  %v806 = vadd.f32 0.0, %v805
  %v807 = vpop.f32.mrb[0].mxu0
  %808 = vmatprep.mubr.bf16.mxu0 0
  %809 = vmatmul.mubr.bf16.gmra.mrb[0].mxu0 %v619
  %v810 = vpop.f32.mrb[0].mxu0
  %v811 = vadd.f32 0.0, %v810
  %v812 = vpop.f32.mrb[0].mxu0
  %v813 = vpop.f32.mrb[0].mxu0
  %v814 = vadd.f32 0.0, %v813
  %v815 = vpop.f32.mrb[0].mxu0
  %816 = vmatprep.mubr.bf16.mxu0 0
  %817 = vmatmul.mubr.bf16.gmra.mrb[0].mxu0 %v620
  %v818 = vpop.f32.mrb[0].mxu0
  %v819 = vadd.f32 0.0, %v818
  %v820 = vpop.f32.mrb[0].mxu0
  %v821 = vpop.f32.mrb[0].mxu0
  %v822 = vadd.f32 0.0, %v821
  %v823 = vpop.f32.mrb[0].mxu0
  %824 = vmatprep.mubr.bf16.mxu0 0
  %825 = vmatmul.mubr.bf16.gmra.mrb[0].mxu0 %v621
  %v826 = vpop.f32.mrb[0].mxu0
  %v827 = vadd.f32 0.0, %v826
  %v828 = vpop.f32.mrb[0].mxu0
  %v829 = vpop.f32.mrb[0].mxu0
  %v830 = vadd.f32 0.0, %v829
  %v831 = vpop.f32.mrb[0].mxu0
  %832 = vmatprep.mubr.bf16.mxu0 0
  %833 = vmatmul.mubr.bf16.gmra.mrb[0].mxu0 %v622
  %v834 = vpop.f32.mrb[0].mxu0
  %v835 = vadd.f32 0.0, %v834
  %v836 = vpop.f32.mrb[0].mxu0
  %v837 = vpop.f32.mrb[0].mxu0
  %v838 = vadd.f32 0.0, %v837
  %v839 = vpop.f32.mrb[0].mxu0
  %840 = vmatprep.mubr.bf16.mxu0 0
  %841 = vmatmul.mubr.bf16.gmra.mrb[0].mxu0 %v623
  %v842 = vpop.f32.mrb[0].mxu0
  %v843 = vadd.f32 0.0, %v842
  %v844 = vpop.f32.mrb[0].mxu0
  %v845 = vpop.f32.mrb[0].mxu0
  %v846 = vadd.f32 0.0, %v845
  %v847 = vpop.f32.mrb[0].mxu0
  %848 = vdwg.mxu0
  %v849 = vpack.c.bf16 %v726, %v723
  %v850 = vpack.c.bf16 %v734, %v731
  %v851 = vpack.c.bf16 %v742, %v739
  %v852 = vpack.c.bf16 %v750, %v747
  %v853 = vpack.c.bf16 %v758, %v755
  %v854 = vpack.c.bf16 %v766, %v763
  %v855 = vpack.c.bf16 %v774, %v771
  %v856 = vpack.c.bf16 %v782, %v779
  %v857 = vpack.c.bf16 %v790, %v787
  %v858 = vpack.c.bf16 %v798, %v795
  %v859 = vpack.c.bf16 %v806, %v803
  %v860 = vpack.c.bf16 %v814, %v811
  %v861 = vpack.c.bf16 %v822, %v819
  %v862 = vpack.c.bf16 %v830, %v827
  %v863 = vpack.c.bf16 %v838, %v835
  %v864 = vpack.c.bf16 %v846, %v843
  %v865 = vld [vmem:[%s4] sm:$0x1]
  %v867 = vlaneseq
  %v868 = vshrl.u32 %v867, 7
  %v869 = vsub.s32 0, %v868
  %v870 = vrot.slane %v865, %v869
  %872 = vmatprep.subr.bf16.mxu0 0
  %873 = vmatpush1.bf16.msra.mxu0 %v849
  %874 = vmatprep.subr.bf16.mxu0 0
  %875 = vmatpush1.bf16.msra.mxu0 %v850
  %876 = vmatprep.subr.bf16.mxu0 0
  %877 = vmatpush1.bf16.msra.mxu0 %v851
  %878 = vmatprep.subr.bf16.mxu0 0
  %879 = vmatpush1.bf16.msra.mxu0 %v852
  %880 = vmatprep.subr.bf16.mxu0 0
  %881 = vmatpush1.bf16.msra.mxu0 %v853
  %882 = vmatprep.subr.bf16.mxu0 0
  %883 = vmatpush1.bf16.msra.mxu0 %v854
  %884 = vmatprep.subr.bf16.mxu0 0
  %885 = vmatpush1.bf16.msra.mxu0 %v855
  %886 = vmatprep.subr.bf16.mxu0 0
  %887 = vmatpush1.bf16.msra.mxu0 %v856
  %888 = vmatprep.subr.bf16.mxu0 0
  %889 = vmatpush1.bf16.msra.mxu0 %v857
  %890 = vmatprep.subr.bf16.mxu0 0
  %891 = vmatpush1.bf16.msra.mxu0 %v858
  %892 = vmatprep.subr.bf16.mxu0 0
  %893 = vmatpush1.bf16.msra.mxu0 %v859
  %894 = vmatprep.subr.bf16.mxu0 0
  %895 = vmatpush1.bf16.msra.mxu0 %v860
  %896 = vmatprep.subr.bf16.mxu0 0
  %897 = vmatpush1.bf16.msra.mxu0 %v861
  %898 = vmatprep.subr.bf16.mxu0 0
  %899 = vmatpush1.bf16.msra.mxu0 %v862
  %900 = vmatprep.subr.bf16.mxu0 0
  %901 = vmatpush1.bf16.msra.mxu0 %v863
  %902 = vmatprep.subr.bf16.mxu0 0
  %903 = vmatpush1.bf16.msra.mxu0 %v864
  %904 = vmatprep.mubr.bf16.mxu0 %v182
  %905 = vmatmul.mubr.bf16.gmra.mrb[0].mxu0 %v181
  %v906 = vpop.f32.mrb[0].mxu0
  %v907 = vadd.f32 %v870, %v906
  %v908 = vpop.f32.mrb[0].mxu0
  %v909 = vpop.f32.mrb[0].mxu0
  %v910 = vadd.f32 %v870, %v909
  %v911 = vpop.f32.mrb[0].mxu0
  %912 = vmatprep.mubr.bf16.mxu0 %v184
  %913 = vmatmul.mubr.bf16.gmra.mrb[0].mxu0 %v183
  %v914 = vpop.f32.mrb[0].mxu0
  %v915 = vadd.f32 %v870, %v914
  %v916 = vpop.f32.mrb[0].mxu0
  %v917 = vpop.f32.mrb[0].mxu0
  %v918 = vadd.f32 %v870, %v917
  %v919 = vpop.f32.mrb[0].mxu0
  %920 = vmatprep.mubr.bf16.mxu0 %v186
  %921 = vmatmul.mubr.bf16.gmra.mrb[0].mxu0 %v185
  %v922 = vpop.f32.mrb[0].mxu0
  %v923 = vadd.f32 %v870, %v922
  %v924 = vpop.f32.mrb[0].mxu0
  %v925 = vpop.f32.mrb[0].mxu0
  %v926 = vadd.f32 %v870, %v925
  %v927 = vpop.f32.mrb[0].mxu0
  %928 = vmatprep.mubr.bf16.mxu0 %v188
  %929 = vmatmul.mubr.bf16.gmra.mrb[0].mxu0 %v187
  %v930 = vpop.f32.mrb[0].mxu0
  %v931 = vadd.f32 %v870, %v930
  %v932 = vpop.f32.mrb[0].mxu0
  %v933 = vpop.f32.mrb[0].mxu0
  %v934 = vadd.f32 %v870, %v933
  %v935 = vpop.f32.mrb[0].mxu0
  %936 = vmatprep.mubr.bf16.mxu0 %v190
  %937 = vmatmul.mubr.bf16.gmra.mrb[0].mxu0 %v189
  %v938 = vpop.f32.mrb[0].mxu0
  %v939 = vadd.f32 %v870, %v938
  %v940 = vpop.f32.mrb[0].mxu0
  %v941 = vpop.f32.mrb[0].mxu0
  %v942 = vadd.f32 %v870, %v941
  %v943 = vpop.f32.mrb[0].mxu0
  %944 = vmatprep.mubr.bf16.mxu0 %v192
  %945 = vmatmul.mubr.bf16.gmra.mrb[0].mxu0 %v191
  %v946 = vpop.f32.mrb[0].mxu0
  %v947 = vadd.f32 %v870, %v946
  %v948 = vpop.f32.mrb[0].mxu0
  %v949 = vpop.f32.mrb[0].mxu0
  %v950 = vadd.f32 %v870, %v949
  %v951 = vpop.f32.mrb[0].mxu0
  %952 = vmatprep.mubr.bf16.mxu0 %v194
  %953 = vmatmul.mubr.bf16.gmra.mrb[0].mxu0 %v193
  %v954 = vpop.f32.mrb[0].mxu0
  %v955 = vadd.f32 %v870, %v954
  %v956 = vpop.f32.mrb[0].mxu0
  %v957 = vpop.f32.mrb[0].mxu0
  %v958 = vadd.f32 %v870, %v957
  %v959 = vpop.f32.mrb[0].mxu0
  %960 = vmatprep.mubr.bf16.mxu0 %v196
  %961 = vmatmul.mubr.bf16.gmra.mrb[0].mxu0 %v195
  %v962 = vpop.f32.mrb[0].mxu0
  %v963 = vadd.f32 %v870, %v962
  %v964 = vpop.f32.mrb[0].mxu0
  %v965 = vpop.f32.mrb[0].mxu0
  %v966 = vadd.f32 %v870, %v965
  %v967 = vpop.f32.mrb[0].mxu0
  %968 = vmatprep.mubr.bf16.mxu0 %v198
  %969 = vmatmul.mubr.bf16.gmra.mrb[0].mxu0 %v197
  %v970 = vpop.f32.mrb[0].mxu0
  %v971 = vadd.f32 %v870, %v970
  %v972 = vpop.f32.mrb[0].mxu0
  %v973 = vpop.f32.mrb[0].mxu0
  %v974 = vadd.f32 %v870, %v973
  %v975 = vpop.f32.mrb[0].mxu0
  %976 = vmatprep.mubr.bf16.mxu0 %v200
  %977 = vmatmul.mubr.bf16.gmra.mrb[0].mxu0 %v199
  %v978 = vpop.f32.mrb[0].mxu0
  %v979 = vadd.f32 %v870, %v978
  %v980 = vpop.f32.mrb[0].mxu0
  %v981 = vpop.f32.mrb[0].mxu0
  %v982 = vadd.f32 %v870, %v981
  %v983 = vpop.f32.mrb[0].mxu0
  %984 = vmatprep.mubr.bf16.mxu0 %v202
  %985 = vmatmul.mubr.bf16.gmra.mrb[0].mxu0 %v201
  %v986 = vpop.f32.mrb[0].mxu0
  %v987 = vadd.f32 %v870, %v986
  %v988 = vpop.f32.mrb[0].mxu0
  %v989 = vpop.f32.mrb[0].mxu0
  %v990 = vadd.f32 %v870, %v989
  %v991 = vpop.f32.mrb[0].mxu0
  %992 = vmatprep.mubr.bf16.mxu0 %v204
  %993 = vmatmul.mubr.bf16.gmra.mrb[0].mxu0 %v203
  %v994 = vpop.f32.mrb[0].mxu0
  %v995 = vadd.f32 %v870, %v994
  %v996 = vpop.f32.mrb[0].mxu0
  %v997 = vpop.f32.mrb[0].mxu0
  %v998 = vadd.f32 %v870, %v997
  %v999 = vpop.f32.mrb[0].mxu0
  %1000 = vmatprep.mubr.bf16.mxu0 %v206
  %1001 = vmatmul.mubr.bf16.gmra.mrb[0].mxu0 %v205
  %v1002 = vpop.f32.mrb[0].mxu0
  %v1003 = vadd.f32 %v870, %v1002
  %v1004 = vpop.f32.mrb[0].mxu0
  %v1005 = vpop.f32.mrb[0].mxu0
  %v1006 = vadd.f32 %v870, %v1005
  %v1007 = vpop.f32.mrb[0].mxu0
  %1008 = vmatprep.mubr.bf16.mxu0 %v208
  %1009 = vmatmul.mubr.bf16.gmra.mrb[0].mxu0 %v207
  %v1010 = vpop.f32.mrb[0].mxu0
  %v1011 = vadd.f32 %v870, %v1010
  %v1012 = vpop.f32.mrb[0].mxu0
  %v1013 = vpop.f32.mrb[0].mxu0
  %v1014 = vadd.f32 %v870, %v1013
  %v1015 = vpop.f32.mrb[0].mxu0
  %1016 = vmatprep.mubr.bf16.mxu0 %v210
  %1017 = vmatmul.mubr.bf16.gmra.mrb[0].mxu0 %v209
  %v1018 = vpop.f32.mrb[0].mxu0
  %v1019 = vadd.f32 %v870, %v1018
  %v1020 = vpop.f32.mrb[0].mxu0
  %v1021 = vpop.f32.mrb[0].mxu0
  %v1022 = vadd.f32 %v870, %v1021
  %v1023 = vpop.f32.mrb[0].mxu0
  %1024 = vmatprep.mubr.bf16.mxu0 %v212
  %1025 = vmatmul.mubr.bf16.gmra.mrb[0].mxu0 %v211
  %v1026 = vpop.f32.mrb[0].mxu0
  %v1027 = vadd.f32 %v870, %v1026
  %v1028 = vpop.f32.mrb[0].mxu0
  %v1029 = vpop.f32.mrb[0].mxu0
  %v1030 = vadd.f32 %v870, %v1029
  %v1031 = vpop.f32.mrb[0].mxu0
  %1032 = vdwg.mxu0
  %vm1033 = vcmp.lt.s32.totalorder %v503, 4
  %v1034 = vsel %vm1033, %v907, -1e+30
  %v1035 = vsel %vm1033, %v910, -1e+30
  %v1036 = vsel %vm1033, %v915, -1e+30
  %v1037 = vsel %vm1033, %v918, -1e+30
  %v1038 = vsel %vm1033, %v923, -1e+30
  %v1039 = vsel %vm1033, %v926, -1e+30
  %v1040 = vsel %vm1033, %v931, -1e+30
  %v1041 = vsel %vm1033, %v934, -1e+30
  %v1042 = vsel %vm1033, %v939, -1e+30
  %v1043 = vsel %vm1033, %v942, -1e+30
  %v1044 = vsel %vm1033, %v947, -1e+30
  %v1045 = vsel %vm1033, %v950, -1e+30
  %v1046 = vsel %vm1033, %v955, -1e+30
  %v1047 = vsel %vm1033, %v958, -1e+30
  %v1048 = vsel %vm1033, %v963, -1e+30
  %v1049 = vsel %vm1033, %v966, -1e+30
  %v1050 = vsel %vm1033, %v971, -1e+30
  %v1051 = vsel %vm1033, %v974, -1e+30
  %v1052 = vsel %vm1033, %v979, -1e+30
  %v1053 = vsel %vm1033, %v982, -1e+30
  %v1054 = vsel %vm1033, %v987, -1e+30
  %v1055 = vsel %vm1033, %v990, -1e+30
  %v1056 = vsel %vm1033, %v995, -1e+30
  %v1057 = vsel %vm1033, %v998, -1e+30
  %v1058 = vsel %vm1033, %v1003, -1e+30
  %v1059 = vsel %vm1033, %v1006, -1e+30
  %v1060 = vsel %vm1033, %v1011, -1e+30
  %v1061 = vsel %vm1033, %v1014, -1e+30
  %v1062 = vsel %vm1033, %v1019, -1e+30
  %v1063 = vsel %vm1033, %v1022, -1e+30
  %v1064 = vsel %vm1033, %v1027, -1e+30
  %v1065 = vsel %vm1033, %v1030, -1e+30
  %1066 = vmax.xlane.f32.xlu0 %v1034
  %v1067 = vpop.xlane.xlu0 %1066
  %1068 = vmax.xlane.f32.xlu0 %v1035
  %v1069 = vpop.xlane.xlu0 %1068
  %1070 = vmax.xlane.f32.xlu0 %v1036
  %v1071 = vpop.xlane.xlu0 %1070
  %1072 = vmax.xlane.f32.xlu0 %v1037
  %v1073 = vpop.xlane.xlu0 %1072
  %1074 = vmax.xlane.f32.xlu0 %v1038
  %v1075 = vpop.xlane.xlu0 %1074
  %1076 = vmax.xlane.f32.xlu0 %v1039
  %v1077 = vpop.xlane.xlu0 %1076
  %1078 = vmax.xlane.f32.xlu0 %v1040
  %v1079 = vpop.xlane.xlu0 %1078
  %1080 = vmax.xlane.f32.xlu0 %v1041
  %v1081 = vpop.xlane.xlu0 %1080
  %1082 = vmax.xlane.f32.xlu0 %v1042
  %v1083 = vpop.xlane.xlu0 %1082
  %1084 = vmax.xlane.f32.xlu0 %v1043
  %v1085 = vpop.xlane.xlu0 %1084
  %1086 = vmax.xlane.f32.xlu0 %v1044
  %v1087 = vpop.xlane.xlu0 %1086
  %1088 = vmax.xlane.f32.xlu0 %v1045
  %v1089 = vpop.xlane.xlu0 %1088
  %1090 = vmax.xlane.f32.xlu0 %v1046
  %v1091 = vpop.xlane.xlu0 %1090
  %1092 = vmax.xlane.f32.xlu0 %v1047
  %v1093 = vpop.xlane.xlu0 %1092
  %1094 = vmax.xlane.f32.xlu0 %v1048
  %v1095 = vpop.xlane.xlu0 %1094
  %1096 = vmax.xlane.f32.xlu0 %v1049
  %v1097 = vpop.xlane.xlu0 %1096
  %1098 = vmax.xlane.f32.xlu0 %v1050
  %v1099 = vpop.xlane.xlu0 %1098
  %1100 = vmax.xlane.f32.xlu0 %v1051
  %v1101 = vpop.xlane.xlu0 %1100
  %1102 = vmax.xlane.f32.xlu0 %v1052
  %v1103 = vpop.xlane.xlu0 %1102
  %1104 = vmax.xlane.f32.xlu0 %v1053
  %v1105 = vpop.xlane.xlu0 %1104
  %1106 = vmax.xlane.f32.xlu0 %v1054
  %v1107 = vpop.xlane.xlu0 %1106
  %1108 = vmax.xlane.f32.xlu0 %v1055
  %v1109 = vpop.xlane.xlu0 %1108
  %1110 = vmax.xlane.f32.xlu0 %v1056
  %v1111 = vpop.xlane.xlu0 %1110
  %1112 = vmax.xlane.f32.xlu0 %v1057
  %v1113 = vpop.xlane.xlu0 %1112
  %1114 = vmax.xlane.f32.xlu0 %v1058
  %v1115 = vpop.xlane.xlu0 %1114
  %1116 = vmax.xlane.f32.xlu0 %v1059
  %v1117 = vpop.xlane.xlu0 %1116
  %1118 = vmax.xlane.f32.xlu0 %v1060
  %v1119 = vpop.xlane.xlu0 %1118
  %1120 = vmax.xlane.f32.xlu0 %v1061
  %v1121 = vpop.xlane.xlu0 %1120
  %1122 = vmax.xlane.f32.xlu0 %v1062
  %v1123 = vpop.xlane.xlu0 %1122
  %1124 = vmax.xlane.f32.xlu0 %v1063
  %v1125 = vpop.xlane.xlu0 %1124
  %1126 = vmax.xlane.f32.xlu0 %v1064
  %v1127 = vpop.xlane.xlu0 %1126
  %1128 = vmax.xlane.f32.xlu0 %v1065
  %v1129 = vpop.xlane.xlu0 %1128
  %v1130 = vsub.f32 %v1034, %v1067
  %v1131 = vsub.f32 %v1035, %v1069
  %v1132 = vsub.f32 %v1036, %v1071
  %v1133 = vsub.f32 %v1037, %v1073
  %v1134 = vsub.f32 %v1038, %v1075
  %v1135 = vsub.f32 %v1039, %v1077
  %v1136 = vsub.f32 %v1040, %v1079
  %v1137 = vsub.f32 %v1041, %v1081
  %v1138 = vsub.f32 %v1042, %v1083
  %v1139 = vsub.f32 %v1043, %v1085
  %v1140 = vsub.f32 %v1044, %v1087
  %v1141 = vsub.f32 %v1045, %v1089
  %v1142 = vsub.f32 %v1046, %v1091
  %v1143 = vsub.f32 %v1047, %v1093
  %v1144 = vsub.f32 %v1048, %v1095
  %v1145 = vsub.f32 %v1049, %v1097
  %v1146 = vsub.f32 %v1050, %v1099
  %v1147 = vsub.f32 %v1051, %v1101
  %v1148 = vsub.f32 %v1052, %v1103
  %v1149 = vsub.f32 %v1053, %v1105
  %v1150 = vsub.f32 %v1054, %v1107
  %v1151 = vsub.f32 %v1055, %v1109
  %v1152 = vsub.f32 %v1056, %v1111
  %v1153 = vsub.f32 %v1057, %v1113
  %v1154 = vsub.f32 %v1058, %v1115
  %v1155 = vsub.f32 %v1059, %v1117
  %v1156 = vsub.f32 %v1060, %v1119
  %v1157 = vsub.f32 %v1061, %v1121
  %v1158 = vsub.f32 %v1062, %v1123
  %v1159 = vsub.f32 %v1063, %v1125
  %v1160 = vsub.f32 %v1064, %v1127
  %v1161 = vsub.f32 %v1065, %v1129
  %v1162 = vmul.f32 %v1130, 1.442695
  %v1163 = vpow.pop %v1162
  %v1164 = vmul.f32 %v1131, 1.442695
  %v1165 = vpow.pop %v1164
  %v1166 = vmul.f32 %v1132, 1.442695
  %v1167 = vpow.pop %v1166
  %v1168 = vmul.f32 %v1133, 1.442695
  %v1169 = vpow.pop %v1168
  %v1170 = vmul.f32 %v1134, 1.442695
  %v1171 = vpow.pop %v1170
  %v1172 = vmul.f32 %v1135, 1.442695
  %v1173 = vpow.pop %v1172
  %v1174 = vmul.f32 %v1136, 1.442695
  %v1175 = vpow.pop %v1174
  %v1176 = vmul.f32 %v1137, 1.442695
  %v1177 = vpow.pop %v1176
  %v1178 = vmul.f32 %v1138, 1.442695
  %v1179 = vpow.pop %v1178
  %v1180 = vmul.f32 %v1139, 1.442695
  %v1181 = vpow.pop %v1180
  %v1182 = vmul.f32 %v1140, 1.442695
  %v1183 = vpow.pop %v1182
  %v1184 = vmul.f32 %v1141, 1.442695
  %v1185 = vpow.pop %v1184
  %v1186 = vmul.f32 %v1142, 1.442695
  %v1187 = vpow.pop %v1186
  %v1188 = vmul.f32 %v1143, 1.442695
  %v1189 = vpow.pop %v1188
  %v1190 = vmul.f32 %v1144, 1.442695
  %v1191 = vpow.pop %v1190
  %v1192 = vmul.f32 %v1145, 1.442695
  %v1193 = vpow.pop %v1192
  %v1194 = vmul.f32 %v1146, 1.442695
  %v1195 = vpow.pop %v1194
  %v1196 = vmul.f32 %v1147, 1.442695
  %v1197 = vpow.pop %v1196
  %v1198 = vmul.f32 %v1148, 1.442695
  %v1199 = vpow.pop %v1198
  %v1200 = vmul.f32 %v1149, 1.442695
  %v1201 = vpow.pop %v1200
  %v1202 = vmul.f32 %v1150, 1.442695
  %v1203 = vpow.pop %v1202
  %v1204 = vmul.f32 %v1151, 1.442695
  %v1205 = vpow.pop %v1204
  %v1206 = vmul.f32 %v1152, 1.442695
  %v1207 = vpow.pop %v1206
  %v1208 = vmul.f32 %v1153, 1.442695
  %v1209 = vpow.pop %v1208
  %v1210 = vmul.f32 %v1154, 1.442695
  %v1211 = vpow.pop %v1210
  %v1212 = vmul.f32 %v1155, 1.442695
  %v1213 = vpow.pop %v1212
  %v1214 = vmul.f32 %v1156, 1.442695
  %v1215 = vpow.pop %v1214
  %v1216 = vmul.f32 %v1157, 1.442695
  %v1217 = vpow.pop %v1216
  %v1218 = vmul.f32 %v1158, 1.442695
  %v1219 = vpow.pop %v1218
  %v1220 = vmul.f32 %v1159, 1.442695
  %v1221 = vpow.pop %v1220
  %v1222 = vmul.f32 %v1160, 1.442695
  %v1223 = vpow.pop %v1222
  %v1224 = vmul.f32 %v1161, 1.442695
  %v1225 = vpow.pop %v1224
  %1226 = vadd.xlane.f32.xlu0 %v1163
  %v1227 = vpop.xlane.xlu0 %1226
  %1228 = vadd.xlane.f32.xlu0 %v1165
  %v1229 = vpop.xlane.xlu0 %1228
  %1230 = vadd.xlane.f32.xlu0 %v1167
  %v1231 = vpop.xlane.xlu0 %1230
  %1232 = vadd.xlane.f32.xlu0 %v1169
  %v1233 = vpop.xlane.xlu0 %1232
  %1234 = vadd.xlane.f32.xlu0 %v1171
  %v1235 = vpop.xlane.xlu0 %1234
  %1236 = vadd.xlane.f32.xlu0 %v1173
  %v1237 = vpop.xlane.xlu0 %1236
  %1238 = vadd.xlane.f32.xlu0 %v1175
  %v1239 = vpop.xlane.xlu0 %1238
  %1240 = vadd.xlane.f32.xlu0 %v1177
  %v1241 = vpop.xlane.xlu0 %1240
  %1242 = vadd.xlane.f32.xlu0 %v1179
  %v1243 = vpop.xlane.xlu0 %1242
  %1244 = vadd.xlane.f32.xlu0 %v1181
  %v1245 = vpop.xlane.xlu0 %1244
  %1246 = vadd.xlane.f32.xlu0 %v1183
  %v1247 = vpop.xlane.xlu0 %1246
  %1248 = vadd.xlane.f32.xlu0 %v1185
  %v1249 = vpop.xlane.xlu0 %1248
  %1250 = vadd.xlane.f32.xlu0 %v1187
  %v1251 = vpop.xlane.xlu0 %1250
  %1252 = vadd.xlane.f32.xlu0 %v1189
  %v1253 = vpop.xlane.xlu0 %1252
  %1254 = vadd.xlane.f32.xlu0 %v1191
  %v1255 = vpop.xlane.xlu0 %1254
  %1256 = vadd.xlane.f32.xlu0 %v1193
  %v1257 = vpop.xlane.xlu0 %1256
  %1258 = vadd.xlane.f32.xlu0 %v1195
  %v1259 = vpop.xlane.xlu0 %1258
  %1260 = vadd.xlane.f32.xlu0 %v1197
  %v1261 = vpop.xlane.xlu0 %1260
  %1262 = vadd.xlane.f32.xlu0 %v1199
  %v1263 = vpop.xlane.xlu0 %1262
  %1264 = vadd.xlane.f32.xlu0 %v1201
  %v1265 = vpop.xlane.xlu0 %1264
  %1266 = vadd.xlane.f32.xlu0 %v1203
  %v1267 = vpop.xlane.xlu0 %1266
  %1268 = vadd.xlane.f32.xlu0 %v1205
  %v1269 = vpop.xlane.xlu0 %1268
  %1270 = vadd.xlane.f32.xlu0 %v1207
  %v1271 = vpop.xlane.xlu0 %1270
  %1272 = vadd.xlane.f32.xlu0 %v1209
  %v1273 = vpop.xlane.xlu0 %1272
  %1274 = vadd.xlane.f32.xlu0 %v1211
  %v1275 = vpop.xlane.xlu0 %1274
  %1276 = vadd.xlane.f32.xlu0 %v1213
  %v1277 = vpop.xlane.xlu0 %1276
  %1278 = vadd.xlane.f32.xlu0 %v1215
  %v1279 = vpop.xlane.xlu0 %1278
  %1280 = vadd.xlane.f32.xlu0 %v1217
  %v1281 = vpop.xlane.xlu0 %1280
  %1282 = vadd.xlane.f32.xlu0 %v1219
  %v1283 = vpop.xlane.xlu0 %1282
  %1284 = vadd.xlane.f32.xlu0 %v1221
  %v1285 = vpop.xlane.xlu0 %1284
  %1286 = vadd.xlane.f32.xlu0 %v1223
  %v1287 = vpop.xlane.xlu0 %1286
  %1288 = vadd.xlane.f32.xlu0 %v1225
  %v1289 = vpop.xlane.xlu0 %1288
  %v1290 = vlog2.pop %v1227
  %v1291 = vmul.f32 %v1290, 0.6931472
  %v1292 = vlog2.pop %v1229
  %v1293 = vmul.f32 %v1292, 0.6931472
  %v1294 = vlog2.pop %v1231
  %v1295 = vmul.f32 %v1294, 0.6931472
  %v1296 = vlog2.pop %v1233
  %v1297 = vmul.f32 %v1296, 0.6931472
  %v1298 = vlog2.pop %v1235
  %v1299 = vmul.f32 %v1298, 0.6931472
  %v1300 = vlog2.pop %v1237
  %v1301 = vmul.f32 %v1300, 0.6931472
  %v1302 = vlog2.pop %v1239
  %v1303 = vmul.f32 %v1302, 0.6931472
  %v1304 = vlog2.pop %v1241
  %v1305 = vmul.f32 %v1304, 0.6931472
  %v1306 = vlog2.pop %v1243
  %v1307 = vmul.f32 %v1306, 0.6931472
  %v1308 = vlog2.pop %v1245
  %v1309 = vmul.f32 %v1308, 0.6931472
  %v1310 = vlog2.pop %v1247
  %v1311 = vmul.f32 %v1310, 0.6931472
  %v1312 = vlog2.pop %v1249
  %v1313 = vmul.f32 %v1312, 0.6931472
  %v1314 = vlog2.pop %v1251
  %v1315 = vmul.f32 %v1314, 0.6931472
  %v1316 = vlog2.pop %v1253
  %v1317 = vmul.f32 %v1316, 0.6931472
  %v1318 = vlog2.pop %v1255
  %v1319 = vmul.f32 %v1318, 0.6931472
  %v1320 = vlog2.pop %v1257
  %v1321 = vmul.f32 %v1320, 0.6931472
  %v1322 = vlog2.pop %v1259
  %v1323 = vmul.f32 %v1322, 0.6931472
  %v1324 = vlog2.pop %v1261
  %v1325 = vmul.f32 %v1324, 0.6931472
  %v1326 = vlog2.pop %v1263
  %v1327 = vmul.f32 %v1326, 0.6931472
  %v1328 = vlog2.pop %v1265
  %v1329 = vmul.f32 %v1328, 0.6931472
  %v1330 = vlog2.pop %v1267
  %v1331 = vmul.f32 %v1330, 0.6931472
  %v1332 = vlog2.pop %v1269
  %v1333 = vmul.f32 %v1332, 0.6931472
  %v1334 = vlog2.pop %v1271
  %v1335 = vmul.f32 %v1334, 0.6931472
  %v1336 = vlog2.pop %v1273
  %v1337 = vmul.f32 %v1336, 0.6931472
  %v1338 = vlog2.pop %v1275
  %v1339 = vmul.f32 %v1338, 0.6931472
  %v1340 = vlog2.pop %v1277
  %v1341 = vmul.f32 %v1340, 0.6931472
  %v1342 = vlog2.pop %v1279
  %v1343 = vmul.f32 %v1342, 0.6931472
  %v1344 = vlog2.pop %v1281
  %v1345 = vmul.f32 %v1344, 0.6931472
  %v1346 = vlog2.pop %v1283
  %v1347 = vmul.f32 %v1346, 0.6931472
  %v1348 = vlog2.pop %v1285
  %v1349 = vmul.f32 %v1348, 0.6931472
  %v1350 = vlog2.pop %v1287
  %v1351 = vmul.f32 %v1350, 0.6931472
  %v1352 = vlog2.pop %v1289
  %v1353 = vmul.f32 %v1352, 0.6931472
  %v1354 = vadd.f32 %v1291, %v1067
  %v1355 = vadd.f32 %v1293, %v1069
  %v1356 = vadd.f32 %v1295, %v1071
  %v1357 = vadd.f32 %v1297, %v1073
  %v1358 = vadd.f32 %v1299, %v1075
  %v1359 = vadd.f32 %v1301, %v1077
  %v1360 = vadd.f32 %v1303, %v1079
  %v1361 = vadd.f32 %v1305, %v1081
  %v1362 = vadd.f32 %v1307, %v1083
  %v1363 = vadd.f32 %v1309, %v1085
  %v1364 = vadd.f32 %v1311, %v1087
  %v1365 = vadd.f32 %v1313, %v1089
  %v1366 = vadd.f32 %v1315, %v1091
  %v1367 = vadd.f32 %v1317, %v1093
  %v1368 = vadd.f32 %v1319, %v1095
  %v1369 = vadd.f32 %v1321, %v1097
  %v1370 = vadd.f32 %v1323, %v1099
  %v1371 = vadd.f32 %v1325, %v1101
  %v1372 = vadd.f32 %v1327, %v1103
  %v1373 = vadd.f32 %v1329, %v1105
  %v1374 = vadd.f32 %v1331, %v1107
  %v1375 = vadd.f32 %v1333, %v1109
  %v1376 = vadd.f32 %v1335, %v1111
  %v1377 = vadd.f32 %v1337, %v1113
  %v1378 = vadd.f32 %v1339, %v1115
  %v1379 = vadd.f32 %v1341, %v1117
  %v1380 = vadd.f32 %v1343, %v1119
  %v1381 = vadd.f32 %v1345, %v1121
  %v1382 = vadd.f32 %v1347, %v1123
  %v1383 = vadd.f32 %v1349, %v1125
  %v1384 = vadd.f32 %v1351, %v1127
  %v1385 = vadd.f32 %v1353, %v1129
  %v1386 = vsub.f32 %v1034, %v1354
  %v1387 = vsub.f32 %v1035, %v1355
  %v1388 = vsub.f32 %v1036, %v1356
  %v1389 = vsub.f32 %v1037, %v1357
  %v1390 = vsub.f32 %v1038, %v1358
  %v1391 = vsub.f32 %v1039, %v1359
  %v1392 = vsub.f32 %v1040, %v1360
  %v1393 = vsub.f32 %v1041, %v1361
  %v1394 = vsub.f32 %v1042, %v1362
  %v1395 = vsub.f32 %v1043, %v1363
  %v1396 = vsub.f32 %v1044, %v1364
  %v1397 = vsub.f32 %v1045, %v1365
  %v1398 = vsub.f32 %v1046, %v1366
  %v1399 = vsub.f32 %v1047, %v1367
  %v1400 = vsub.f32 %v1048, %v1368
  %v1401 = vsub.f32 %v1049, %v1369
  %v1402 = vsub.f32 %v1050, %v1370
  %v1403 = vsub.f32 %v1051, %v1371
  %v1404 = vsub.f32 %v1052, %v1372
  %v1405 = vsub.f32 %v1053, %v1373
  %v1406 = vsub.f32 %v1054, %v1374
  %v1407 = vsub.f32 %v1055, %v1375
  %v1408 = vsub.f32 %v1056, %v1376
  %v1409 = vsub.f32 %v1057, %v1377
  %v1410 = vsub.f32 %v1058, %v1378
  %v1411 = vsub.f32 %v1059, %v1379
  %v1412 = vsub.f32 %v1060, %v1380
  %v1413 = vsub.f32 %v1061, %v1381
  %v1414 = vsub.f32 %v1062, %v1382
  %v1415 = vsub.f32 %v1063, %v1383
  %v1416 = vsub.f32 %v1064, %v1384
  %v1417 = vsub.f32 %v1065, %v1385
  %1418 = vst [vmem:[%s5] sm:$0xff] %v1386
  %1419 = vst [vmem:[%s5 + $0x8] sm:$0xff] %v1387
  %1420 = vst [vmem:[%s5 + $0x10] sm:$0xff] %v1388
  %1421 = vst [vmem:[%s5 + $0x18] sm:$0xff] %v1389
  %1422 = vst [vmem:[%s5 + $0x20] sm:$0xff] %v1390
  %1423 = vst [vmem:[%s5 + $0x28] sm:$0xff] %v1391
  %1424 = vst [vmem:[%s5 + $0x30] sm:$0xff] %v1392
  %1425 = vst [vmem:[%s5 + $0x38] sm:$0xff] %v1393
  %1426 = vst [vmem:[%s5 + $0x40] sm:$0xff] %v1394
  %1427 = vst [vmem:[%s5 + $0x48] sm:$0xff] %v1395
  %1428 = vst [vmem:[%s5 + $0x50] sm:$0xff] %v1396
  %1429 = vst [vmem:[%s5 + $0x58] sm:$0xff] %v1397
  %1430 = vst [vmem:[%s5 + $0x60] sm:$0xff] %v1398
  %1431 = vst [vmem:[%s5 + $0x68] sm:$0xff] %v1399
  %1432 = vst [vmem:[%s5 + $0x70] sm:$0xff] %v1400
  %1433 = vst [vmem:[%s5 + $0x78] sm:$0xff] %v1401
  %1434 = vst [vmem:[%s5 + $0x80] sm:$0xff] %v1402
  %1435 = vst [vmem:[%s5 + $0x88] sm:$0xff] %v1403
  %1436 = vst [vmem:[%s5 + $0x90] sm:$0xff] %v1404
  %1437 = vst [vmem:[%s5 + $0x98] sm:$0xff] %v1405
  %1438 = vst [vmem:[%s5 + $0xa0] sm:$0xff] %v1406
  %1439 = vst [vmem:[%s5 + $0xa8] sm:$0xff] %v1407
  %1440 = vst [vmem:[%s5 + $0xb0] sm:$0xff] %v1408
  %1441 = vst [vmem:[%s5 + $0xb8] sm:$0xff] %v1409
  %1442 = vst [vmem:[%s5 + $0xc0] sm:$0xff] %v1410
  %1443 = vst [vmem:[%s5 + $0xc8] sm:$0xff] %v1411
  %1444 = vst [vmem:[%s5 + $0xd0] sm:$0xff] %v1412
  %1445 = vst [vmem:[%s5 + $0xd8] sm:$0xff] %v1413
  %1446 = vst [vmem:[%s5 + $0xe0] sm:$0xff] %v1414
  %1447 = vst [vmem:[%s5 + $0xe8] sm:$0xff] %v1415
  %1448 = vst [vmem:[%s5 + $0xf0] sm:$0xff] %v1416
  %1449 = vst [vmem:[%s5 + $0xf8] sm:$0xff] %v1417
  // Predicated region
  $region22: #{step_model_forward.1} parent=0 // pred_check
    _
  $region23: #{step_model_forward.1} parent=0 // pred_check_branch
    %1451 = sbr.rel (0) target = $region25
  $region24: #{step_model_forward.1} parent=0 // pred_region
    _
  $region25: #{step_model_forward.1} parent=0 // pred_fallthru
    _
  // Predicated region
  $region26: #{step_model_forward.1} parent=0 // pred_check
    _
  $region27: #{step_model_forward.1} parent=0 // pred_check_branch
    %1453 = sbr.rel (0) target = $region29
  $region28: #{step_model_forward.1} parent=0 // pred_region
    _
  $region29: #{step_model_forward.1} parent=0 // pred_fallthru
    _

</llo_original>
